<compile_context>
chip_gen: v6e
topology: v6e:2x2x1
jax: 0.10.0
libtpu: 0.0.40
codegen_flags: <defaults>
</compile_context>

<pallas_src>
import functools
import math

import jax
import jax.numpy as jnp
from jax.experimental import pallas as pl
from jax.experimental.pallas import tpu as pltpu

# ---- static config (small shapes consistent with the module) ----------------
M_LAYERS = 2      # m
CHANNELS = 4      # channels
BATCH    = 2
H = W    = 16
SEQ      = H * W  # 256 tokens
C_PAD    = 8      # channels zero-padded up to one sublane tile


def prenet_kernel(x_ref, w_ref, wc_ref, bc_ref, o_ref, *,
                  n_layers, c_pad, c, n_batch, seq, exp_in_bf16):
    """Single fused step over the whole (tiny) batch.

    x_ref : (Cp, N*S)      channels-major tokens, batches concatenated on lanes
    w_ref : (m, 3*Cp, Cp)  fused, pre-transposed, zero-padded q/k/v weights
                           (1/sqrt(C) already folded into the Wq block)
    wc_ref: (1, Cp)        1x1-conv weight, transposed + zero-padded
    bc_ref: (1, 1) [SMEM]  1x1-conv bias scalar
    o_ref : (1, N*S)       lane-dense output
    """
    bias = bc_ref[0, 0]
    # Mask selecting the first zero-padded channel row; that row of v is set to
    # ones so the PV matmul also produces r = sum_k p "for free".
    ones_row = jax.lax.broadcasted_iota(jnp.int32, (c_pad, seq), 0) == c

    x_all = x_ref[...].astype(jnp.float32)                         # [Cp, N*S]
    for i in range(n_layers):                                      # m is small, static
        # Fused q/k/v projection for ALL batch tokens at once (K = Cp = 8).
        proj = jnp.dot(w_ref[i], x_all,
                       preferred_element_type=jnp.float32)         # [3Cp, N*S]
        chunks = []
        for b in range(n_batch):                                   # static unroll
            sl = slice(b * seq, (b + 1) * seq)
            q = proj[0:c_pad, sl].astype(jnp.bfloat16)              # scale pre-folded
            k = proj[c_pad:2 * c_pad, sl].astype(jnp.bfloat16)
            v = proj[2 * c_pad:3 * c_pad, sl]
            v_aug = jnp.where(ones_row, 1.0, v).astype(jnp.bfloat16)
            # Transposed scores sT[key, query] WITHOUT materializing k.T:
            # contract the channel (sublane) axis of both operands.
            sT = jax.lax.dot_general(
                k, q, dimension_numbers=(((0,), (0,)), ((), ())),
                preferred_element_type=jnp.float32)                 # [S, S]
            m = jnp.max(sT, axis=0, keepdims=True)                  # [1, S]
            if exp_in_bf16:
                p = jnp.exp((sT - m).astype(jnp.bfloat16))           # bf16 EUP (v6e/v7x)
            else:
                p = jnp.exp(sT - m).astype(jnp.bfloat16)             # f32 EUP (v5e)
            # PV matmul with K = S (full MXU depth): [Cp, S] @ [S, S] -> [Cp, S].
            # Row `c` of the result is r = sum_k p (from the ones row in v_aug).
            u = jnp.dot(v_aug, p, preferred_element_type=jnp.float32)
            r = u[c:c + 1]                                           # [1, S]
            # Deferred softmax normalization on the small tile (EUP reciprocal).
            chunks.append(u * pl.reciprocal(r, approx=True))
        x_all = chunks[0] if n_batch == 1 else jnp.concatenate(chunks, axis=1)
    # 1x1 conv (channels -> 1) over all batch tokens: [1, Cp] @ [Cp, N*S].
    y = jnp.dot(wc_ref[...], x_all, preferred_element_type=jnp.float32) + bias
    o_ref[...] = y.astype(o_ref.dtype)


def _exp_in_bf16():
    """bf16 exp only on chips with a bf16-capable EUP (v6e / v7x)."""
    try:
        kind = jax.devices()[0].device_kind.lower()
    except Exception:
        return False
    return ("v6" in kind) or ("v7" in kind)


@jax.jit
def prenet_forward(x_nchw, wq, wk, wv, wc, bc):
    n, c, h, w = x_nchw.shape
    s = h * w
    m_layers = wq.shape[0]
    c_pad = ((c + 7) // 8) * 8
    scale = 1.0 / math.sqrt(c)

    # Channels-major tokens, batches concatenated along lanes: [Cp, N*S].
    x_cs = jnp.transpose(x_nchw.reshape(n, c, s), (1, 0, 2)).reshape(c, n * s)
    x_cs = jnp.pad(x_cs, ((0, c_pad - c), (0, 0)))

    def pad_t(wm, row_scale=1.0):
        # [m, C, C] -> [m, Cp, Cp] holding W^T (rows = out ch, cols = in ch).
        # Zero-padded input COLUMNS annihilate the padded activation rows.
        wt = jnp.swapaxes(wm, -1, -2) * row_scale
        return jnp.pad(wt, ((0, 0), (0, c_pad - c), (0, c_pad - c)))

    # Fused projection weights [m, 3*Cp, Cp]; 1/sqrt(C) folded into Wq.
    w_fused = jnp.concatenate([pad_t(wq, scale), pad_t(wk), pad_t(wv)], axis=1)
    wc_t = jnp.pad(wc.T, ((0, 0), (0, c_pad - c)))                 # [1, Cp]

    kernel = functools.partial(
        prenet_kernel, n_layers=m_layers, c_pad=c_pad, c=c,
        n_batch=n, seq=s, exp_in_bf16=_exp_in_bf16())

    out = pl.pallas_call(
        kernel,
        out_shape=jax.ShapeDtypeStruct((1, n * s), x_nchw.dtype),
        grid_spec=pltpu.PrefetchScalarGridSpec(
            num_scalar_prefetch=0,
            grid=(1,),
            in_specs=[
                pl.BlockSpec((c_pad, n * s), lambda i: (0, 0)),                   # x
                pl.BlockSpec((m_layers, 3 * c_pad, c_pad), lambda i: (0, 0, 0)),  # Wqkv^T
                pl.BlockSpec((1, c_pad), lambda i: (0, 0)),                       # conv W^T
                pl.BlockSpec(memory_space=pltpu.MemorySpace.SMEM),                # conv bias
            ],
            out_specs=pl.BlockSpec((1, n * s), lambda i: (0, 0)),
        ),
        compiler_params=pltpu.CompilerParams(dimension_semantics=("arbitrary",)),
    )(x_cs, w_fused, wc_t, bc)

    # [1, N*S] -> [N, 1, H, W]: plain reshape (batch-major token order), no transpose.
    return out.reshape(n, 1, h, w)


def prenet_ref(x_nchw, wq, wk, wv, wc, bc):
    """Pure-JAX reference with the original module's semantics (for verification)."""
    n, c, h, w = x_nchw.shape
    x = jnp.transpose(x_nchw, (0, 2, 3, 1)).reshape(n, h * w, c).astype(jnp.float32)
    scale = 1.0 / math.sqrt(c)
    for i in range(wq.shape[0]):
        q = x @ wq[i]
        k = x @ wk[i]
        v = x @ wv[i]
        p = jax.nn.softmax((q @ jnp.swapaxes(k, -1, -2)) * scale, axis=-1)
        x = p @ v
    y = x @ wc + bc[0, 0]
    return y.reshape(n, h, w, 1).transpose(0, 3, 1, 2)


if __name__ == "__main__":
    key = jax.random.PRNGKey(0)
    k_x, k_q, k_k, k_v, k_c, k_b = jax.random.split(key, 6)

    # deterministic synthetic parameters (shapes implied by the module __init__)
    x  = jax.random.normal(k_x, (BATCH, CHANNELS, H, W), dtype=jnp.float32)
    wq = 0.2 * jax.random.normal(k_q, (M_LAYERS, CHANNELS, CHANNELS), dtype=jnp.float32)
    wk = 0.2 * jax.random.normal(k_k, (M_LAYERS, CHANNELS, CHANNELS), dtype=jnp.float32)
    wv = 0.2 * jax.random.normal(k_v, (M_LAYERS, CHANNELS, CHANNELS), dtype=jnp.float32)
    wc = 0.2 * jax.random.normal(k_c, (CHANNELS, 1), dtype=jnp.float32)
    bc = 0.1 * jax.random.normal(k_b, (1, 1), dtype=jnp.float32)

    out = jax.block_until_ready(prenet_forward(x, wq, wk, wv, wc, bc))
    ref = jax.block_until_ready(prenet_ref(x, wq, wk, wv, wc, bc))

    assert out.shape == (BATCH, 1, H, W), out.shape
    # Tolerance relaxed vs the exact f32 reference: bf16 MXU operands (q/k/v/p),
    # bf16 exp on v6e/v7x, and the EUP approximate reciprocal are deliberate
    # performance/numerics tradeoffs; accumulation stays f32.
    assert jnp.allclose(out, ref, atol=5e-3, rtol=1e-3), float(jnp.max(jnp.abs(out - ref)))
    print("KERNEL_OK")
</pallas_src>

<mosaic_0001>
module attributes {stable_mosaic.version = 11 : i64} {
  func.func @prenet_kernel(%arg0: i32, %arg1: memref<8x512xf32, #tpu.memory_space<vmem>>, %arg2: memref<2x24x8xf32, #tpu.memory_space<vmem>>, %arg3: memref<1x8xf32, #tpu.memory_space<vmem>>, %arg4: memref<1x1xf32, #tpu.memory_space<smem>>, %arg5: memref<1x512xf32, #tpu.memory_space<vmem>>) attributes {dimension_semantics = [#tpu.dimension_semantics<arbitrary>], iteration_bounds = array<i64: 1>, scalar_prefetch = 0 : i64, scratch_operands = 0 : i64, tpu.core_type = #tpu.core_type<tc>, window_params = [{pipeline_mode = #tpu.pipeline_mode<synchronous>, transform_indices = @transform_0, window_bounds = array<i64: 8, 512>}, {pipeline_mode = #tpu.pipeline_mode<synchronous>, transform_indices = @transform_1, window_bounds = array<i64: 2, 24, 8>}, {pipeline_mode = #tpu.pipeline_mode<synchronous>, transform_indices = @transform_2, window_bounds = array<i64: 1, 8>}, {transform_indices = @transform_3, window_bounds = array<i64: 1, 1>}, {pipeline_mode = #tpu.pipeline_mode<synchronous>, transform_indices = @transform_4, window_bounds = array<i64: 1, 512>}]} {
    %c0 = arith.constant 0 : index
    %c0_0 = arith.constant 0 : index
    %0 = memref.load %arg4[%c0, %c0_0] : memref<1x1xf32, #tpu.memory_space<smem>>
    %1 = tpu.iota {dimensions = array<i32: 0>} : vector<8x256xi32>
    %c4_i32 = arith.constant 4 : i32
    %2 = vector.broadcast %c4_i32 : i32 to vector<8x256xi32>
    %3 = arith.cmpi eq, %1, %2 : vector<8x256xi32>
    %c0_1 = arith.constant 0 : index
    %c0_2 = arith.constant 0 : index
    %4 = vector.load %arg1[%c0_1, %c0_2] : memref<8x512xf32, #tpu.memory_space<vmem>>, vector<8x512xf32>
    %c0_3 = arith.constant 0 : index
    %c0_4 = arith.constant 0 : index
    %c0_5 = arith.constant 0 : index
    %5 = vector.load %arg2[%c0_3, %c0_4, %c0_5] : memref<2x24x8xf32, #tpu.memory_space<vmem>>, vector<1x24x8xf32>
    %6 = vector.shape_cast %5 : vector<1x24x8xf32> to vector<24x8xf32>
    %cst = arith.constant dense<0.000000e+00> : vector<24x512xf32>
    %7 = tpu.matmul %6, %4, %cst {dimension_numbers = #tpu.dot_dimension_numbers<[1], [0], [0], [1], [0, 0, 1, 1], [], []>} : vector<24x8xf32>, vector<8x512xf32>, vector<24x512xf32> -> vector<24x512xf32>
    %8 = vector.extract_strided_slice %7 {offsets = [0, 0], sizes = [8, 256], strides = [1, 1]} : vector<24x512xf32> to vector<8x256xf32>
    %9 = arith.truncf %8 : vector<8x256xf32> to vector<8x256xbf16>
    %10 = vector.extract_strided_slice %7 {offsets = [8, 0], sizes = [8, 256], strides = [1, 1]} : vector<24x512xf32> to vector<8x256xf32>
    %11 = arith.truncf %10 : vector<8x256xf32> to vector<8x256xbf16>
    %12 = vector.extract_strided_slice %7 {offsets = [16, 0], sizes = [8, 256], strides = [1, 1]} : vector<24x512xf32> to vector<8x256xf32>
    %cst_6 = arith.constant 1.000000e+00 : f32
    %13 = vector.broadcast %cst_6 : f32 to vector<8x256xf32>
    %14 = arith.select %3, %13, %12 : vector<8x256xi1>, vector<8x256xf32>
    %15 = arith.truncf %14 : vector<8x256xf32> to vector<8x256xbf16>
    %cst_7 = arith.constant dense<0.000000e+00> : vector<256x256xf32>
    %16 = tpu.matmul %11, %9, %cst_7 {dimension_numbers = #tpu.dot_dimension_numbers<[0], [0], [1], [1], [0, 1, 1, 1], [], []>} : vector<8x256xbf16>, vector<8x256xbf16>, vector<256x256xf32> -> vector<256x256xf32>
    %cst_8 = arith.constant dense<0xFF800000> : vector<256xf32>
    %17 = vector.multi_reduction <maximumf>, %16, %cst_8 [0] : vector<256x256xf32> to vector<256xf32>
    %18 = vector.shape_cast %17 : vector<256xf32> to vector<1x256xf32>
    %19 = vector.broadcast %18 : vector<1x256xf32> to vector<256x256xf32>
    %20 = arith.subf %16, %19 : vector<256x256xf32>
    %21 = math.exp %20 : vector<256x256xf32>
    %22 = arith.truncf %21 : vector<256x256xf32> to vector<256x256xbf16>
    %cst_9 = arith.constant dense<0.000000e+00> : vector<8x256xf32>
    %23 = tpu.matmul %15, %22, %cst_9 {dimension_numbers = #tpu.dot_dimension_numbers<[1], [0], [0], [1], [0, 0, 1, 1], [], []>} : vector<8x256xbf16>, vector<256x256xbf16>, vector<8x256xf32> -> vector<8x256xf32>
    %24 = vector.extract_strided_slice %23 {offsets = [4, 0], sizes = [1, 256], strides = [1, 1]} : vector<8x256xf32> to vector<1x256xf32>
    %25 = tpu.reciprocal %24 {approx = true} : vector<1x256xf32> -> vector<1x256xf32>
    %26 = vector.broadcast %25 : vector<1x256xf32> to vector<8x256xf32>
    %27 = arith.mulf %23, %26 : vector<8x256xf32>
    %28 = vector.extract_strided_slice %7 {offsets = [0, 256], sizes = [8, 256], strides = [1, 1]} : vector<24x512xf32> to vector<8x256xf32>
    %29 = arith.truncf %28 : vector<8x256xf32> to vector<8x256xbf16>
    %30 = vector.extract_strided_slice %7 {offsets = [8, 256], sizes = [8, 256], strides = [1, 1]} : vector<24x512xf32> to vector<8x256xf32>
    %31 = arith.truncf %30 : vector<8x256xf32> to vector<8x256xbf16>
    %32 = vector.extract_strided_slice %7 {offsets = [16, 256], sizes = [8, 256], strides = [1, 1]} : vector<24x512xf32> to vector<8x256xf32>
    %cst_10 = arith.constant 1.000000e+00 : f32
    %33 = vector.broadcast %cst_10 : f32 to vector<8x256xf32>
    %34 = arith.select %3, %33, %32 : vector<8x256xi1>, vector<8x256xf32>
    %35 = arith.truncf %34 : vector<8x256xf32> to vector<8x256xbf16>
    %cst_11 = arith.constant dense<0.000000e+00> : vector<256x256xf32>
    %36 = tpu.matmul %31, %29, %cst_11 {dimension_numbers = #tpu.dot_dimension_numbers<[0], [0], [1], [1], [0, 1, 1, 1], [], []>} : vector<8x256xbf16>, vector<8x256xbf16>, vector<256x256xf32> -> vector<256x256xf32>
    %cst_12 = arith.constant dense<0xFF800000> : vector<256xf32>
    %37 = vector.multi_reduction <maximumf>, %36, %cst_12 [0] : vector<256x256xf32> to vector<256xf32>
    %38 = vector.shape_cast %37 : vector<256xf32> to vector<1x256xf32>
    %39 = vector.broadcast %38 : vector<1x256xf32> to vector<256x256xf32>
    %40 = arith.subf %36, %39 : vector<256x256xf32>
    %41 = math.exp %40 : vector<256x256xf32>
    %42 = arith.truncf %41 : vector<256x256xf32> to vector<256x256xbf16>
    %cst_13 = arith.constant dense<0.000000e+00> : vector<8x256xf32>
    %43 = tpu.matmul %35, %42, %cst_13 {dimension_numbers = #tpu.dot_dimension_numbers<[1], [0], [0], [1], [0, 0, 1, 1], [], []>} : vector<8x256xbf16>, vector<256x256xbf16>, vector<8x256xf32> -> vector<8x256xf32>
    %44 = vector.extract_strided_slice %43 {offsets = [4, 0], sizes = [1, 256], strides = [1, 1]} : vector<8x256xf32> to vector<1x256xf32>
    %45 = tpu.reciprocal %44 {approx = true} : vector<1x256xf32> -> vector<1x256xf32>
    %46 = vector.broadcast %45 : vector<1x256xf32> to vector<8x256xf32>
    %47 = arith.mulf %43, %46 : vector<8x256xf32>
    %48 = tpu.concatenate %27, %47 in 1 : vector<8x256xf32>, vector<8x256xf32> -> vector<8x512xf32>
    %c1 = arith.constant 1 : index
    %c0_14 = arith.constant 0 : index
    %c0_15 = arith.constant 0 : index
    %49 = vector.load %arg2[%c1, %c0_14, %c0_15] : memref<2x24x8xf32, #tpu.memory_space<vmem>>, vector<1x24x8xf32>
    %50 = vector.shape_cast %49 : vector<1x24x8xf32> to vector<24x8xf32>
    %cst_16 = arith.constant dense<0.000000e+00> : vector<24x512xf32>
    %51 = tpu.matmul %50, %48, %cst_16 {dimension_numbers = #tpu.dot_dimension_numbers<[1], [0], [0], [1], [0, 0, 1, 1], [], []>} : vector<24x8xf32>, vector<8x512xf32>, vector<24x512xf32> -> vector<24x512xf32>
    %52 = vector.extract_strided_slice %51 {offsets = [0, 0], sizes = [8, 256], strides = [1, 1]} : vector<24x512xf32> to vector<8x256xf32>
    %53 = arith.truncf %52 : vector<8x256xf32> to vector<8x256xbf16>
    %54 = vector.extract_strided_slice %51 {offsets = [8, 0], sizes = [8, 256], strides = [1, 1]} : vector<24x512xf32> to vector<8x256xf32>
    %55 = arith.truncf %54 : vector<8x256xf32> to vector<8x256xbf16>
    %56 = vector.extract_strided_slice %51 {offsets = [16, 0], sizes = [8, 256], strides = [1, 1]} : vector<24x512xf32> to vector<8x256xf32>
    %cst_17 = arith.constant 1.000000e+00 : f32
    %57 = vector.broadcast %cst_17 : f32 to vector<8x256xf32>
    %58 = arith.select %3, %57, %56 : vector<8x256xi1>, vector<8x256xf32>
    %59 = arith.truncf %58 : vector<8x256xf32> to vector<8x256xbf16>
    %cst_18 = arith.constant dense<0.000000e+00> : vector<256x256xf32>
    %60 = tpu.matmul %55, %53, %cst_18 {dimension_numbers = #tpu.dot_dimension_numbers<[0], [0], [1], [1], [0, 1, 1, 1], [], []>} : vector<8x256xbf16>, vector<8x256xbf16>, vector<256x256xf32> -> vector<256x256xf32>
    %cst_19 = arith.constant dense<0xFF800000> : vector<256xf32>
    %61 = vector.multi_reduction <maximumf>, %60, %cst_19 [0] : vector<256x256xf32> to vector<256xf32>
    %62 = vector.shape_cast %61 : vector<256xf32> to vector<1x256xf32>
    %63 = vector.broadcast %62 : vector<1x256xf32> to vector<256x256xf32>
    %64 = arith.subf %60, %63 : vector<256x256xf32>
    %65 = math.exp %64 : vector<256x256xf32>
    %66 = arith.truncf %65 : vector<256x256xf32> to vector<256x256xbf16>
    %cst_20 = arith.constant dense<0.000000e+00> : vector<8x256xf32>
    %67 = tpu.matmul %59, %66, %cst_20 {dimension_numbers = #tpu.dot_dimension_numbers<[1], [0], [0], [1], [0, 0, 1, 1], [], []>} : vector<8x256xbf16>, vector<256x256xbf16>, vector<8x256xf32> -> vector<8x256xf32>
    %68 = vector.extract_strided_slice %67 {offsets = [4, 0], sizes = [1, 256], strides = [1, 1]} : vector<8x256xf32> to vector<1x256xf32>
    %69 = tpu.reciprocal %68 {approx = true} : vector<1x256xf32> -> vector<1x256xf32>
    %70 = vector.broadcast %69 : vector<1x256xf32> to vector<8x256xf32>
    %71 = arith.mulf %67, %70 : vector<8x256xf32>
    %72 = vector.extract_strided_slice %51 {offsets = [0, 256], sizes = [8, 256], strides = [1, 1]} : vector<24x512xf32> to vector<8x256xf32>
    %73 = arith.truncf %72 : vector<8x256xf32> to vector<8x256xbf16>
    %74 = vector.extract_strided_slice %51 {offsets = [8, 256], sizes = [8, 256], strides = [1, 1]} : vector<24x512xf32> to vector<8x256xf32>
    %75 = arith.truncf %74 : vector<8x256xf32> to vector<8x256xbf16>
    %76 = vector.extract_strided_slice %51 {offsets = [16, 256], sizes = [8, 256], strides = [1, 1]} : vector<24x512xf32> to vector<8x256xf32>
    %cst_21 = arith.constant 1.000000e+00 : f32
    %77 = vector.broadcast %cst_21 : f32 to vector<8x256xf32>
    %78 = arith.select %3, %77, %76 : vector<8x256xi1>, vector<8x256xf32>
    %79 = arith.truncf %78 : vector<8x256xf32> to vector<8x256xbf16>
    %cst_22 = arith.constant dense<0.000000e+00> : vector<256x256xf32>
    %80 = tpu.matmul %75, %73, %cst_22 {dimension_numbers = #tpu.dot_dimension_numbers<[0], [0], [1], [1], [0, 1, 1, 1], [], []>} : vector<8x256xbf16>, vector<8x256xbf16>, vector<256x256xf32> -> vector<256x256xf32>
    %cst_23 = arith.constant dense<0xFF800000> : vector<256xf32>
    %81 = vector.multi_reduction <maximumf>, %80, %cst_23 [0] : vector<256x256xf32> to vector<256xf32>
    %82 = vector.shape_cast %81 : vector<256xf32> to vector<1x256xf32>
    %83 = vector.broadcast %82 : vector<1x256xf32> to vector<256x256xf32>
    %84 = arith.subf %80, %83 : vector<256x256xf32>
    %85 = math.exp %84 : vector<256x256xf32>
    %86 = arith.truncf %85 : vector<256x256xf32> to vector<256x256xbf16>
    %cst_24 = arith.constant dense<0.000000e+00> : vector<8x256xf32>
    %87 = tpu.matmul %79, %86, %cst_24 {dimension_numbers = #tpu.dot_dimension_numbers<[1], [0], [0], [1], [0, 0, 1, 1], [], []>} : vector<8x256xbf16>, vector<256x256xbf16>, vector<8x256xf32> -> vector<8x256xf32>
    %88 = vector.extract_strided_slice %87 {offsets = [4, 0], sizes = [1, 256], strides = [1, 1]} : vector<8x256xf32> to vector<1x256xf32>
    %89 = tpu.reciprocal %88 {approx = true} : vector<1x256xf32> -> vector<1x256xf32>
    %90 = vector.broadcast %89 : vector<1x256xf32> to vector<8x256xf32>
    %91 = arith.mulf %87, %90 : vector<8x256xf32>
    %92 = tpu.concatenate %71, %91 in 1 : vector<8x256xf32>, vector<8x256xf32> -> vector<8x512xf32>
    %c0_25 = arith.constant 0 : index
    %c0_26 = arith.constant 0 : index
    %93 = vector.load %arg3[%c0_25, %c0_26] : memref<1x8xf32, #tpu.memory_space<vmem>>, vector<1x8xf32>
    %cst_27 = arith.constant dense<0.000000e+00> : vector<1x512xf32>
    %94 = tpu.matmul %93, %92, %cst_27 {dimension_numbers = #tpu.dot_dimension_numbers<[1], [0], [0], [1], [0, 0, 1, 1], [], []>} : vector<1x8xf32>, vector<8x512xf32>, vector<1x512xf32> -> vector<1x512xf32>
    %95 = vector.broadcast %0 : f32 to vector<1x512xf32>
    %96 = arith.addf %94, %95 : vector<1x512xf32>
    %c0_28 = arith.constant 0 : index
    %c0_29 = arith.constant 0 : index
    %97 = vector.load %arg5[%c0_28, %c0_29] : memref<1x512xf32, #tpu.memory_space<vmem>>, vector<1x512xf32>
    tpu.vector_store %arg5[%c0_28, %c0_29], %96 {strides = array<i32>} : memref<1x512xf32, #tpu.memory_space<vmem>>, vector<1x512xf32>,
    return
  }
  func.func @transform_0(%arg0: i32) -> (i32, i32) {
    %c0_i32 = arith.constant 0 : i32
    %c0_i32_0 = arith.constant 0 : i32
    %c0_i32_1 = arith.constant 0 : i32
    return %c0_i32, %c0_i32_0 : i32, i32
  }
  func.func @transform_1(%arg0: i32) -> (i32, i32, i32) {
    %c0_i32 = arith.constant 0 : i32
    %c0_i32_0 = arith.constant 0 : i32
    %c0_i32_1 = arith.constant 0 : i32
    %c0_i32_2 = arith.constant 0 : i32
    return %c0_i32, %c0_i32_0, %c0_i32_1 : i32, i32, i32
  }
  func.func @transform_2(%arg0: i32) -> (i32, i32) {
    %c0_i32 = arith.constant 0 : i32
    %c0_i32_0 = arith.constant 0 : i32
    %c0_i32_1 = arith.constant 0 : i32
    return %c0_i32, %c0_i32_0 : i32, i32
  }
  func.func @transform_3(%arg0: i32) -> (i32, i32) {
    %c0_i32 = arith.constant 0 : i32
    %c0_i32_0 = arith.constant 0 : i32
    %c0_i32_1 = arith.constant 0 : i32
    return %c0_i32, %c0_i32_0 : i32, i32
  }
  func.func @transform_4(%arg0: i32) -> (i32, i32) {
    %c0_i32 = arith.constant 0 : i32
    %c0_i32_0 = arith.constant 0 : i32
    %c0_i32_1 = arith.constant 0 : i32
    return %c0_i32, %c0_i32_0 : i32, i32
  }
}

</mosaic_0001>

<llo_original>
// kernel: prenet_forward.1
$region0: #{prenet_forward.1}
  #allocation0 [shape = 'u32[]', space=smem, size = 0x4, offset = 0x4, fixed_abs, tag = 'smem constant byte address 0x4 - core index']
  #allocation1 [shape = 'u32[144,128]{1,0:T(1,128)}', space=vmem, size = 0x12000, scoped, tag = 'internal scratch']
  #allocation2 [shape = 'f32[1,1]{1,0:T(1,128)S(6)}', space=smem, size = 0x200, scoped, tag = 'scoped memory for prenet_forward.1']
  %s0 = inlined_call_operand.vmem [shape: f32[8,512], index: 0, kind: input, shape index: {}]
  %s1 = inlined_call_operand.vmem [shape: f32[2,24,8], index: 1, kind: input, shape index: {}]
  %s2 = inlined_call_operand.vmem [shape: f32[1,8], index: 2, kind: input, shape index: {}]
  %s3 = inlined_call_operand.<no memory space> [shape: f32[1,1], index: 3, kind: input, shape index: {}]
  %s4 = inlined_call_operand.vmem [shape: f32[1,512], index: 4, kind: output, shape index: {}]
  %s5 = sld [smem:[#allocation0]]
  $region26: #{prenet_forward.1} parent=0
    _
  %s7 = ssub.s32 1, %s5
  %s8 = scalar_select 0, %s7, %s5
  %9 = sst [smem:[#allocation2]] %s3
  // Predicated region
  $region2: #{prenet_forward.1} parent=0 // pred_check
    _
  $region3: #{prenet_forward.1} parent=0 // pred_check_branch
    %11 = sbr.rel (0) target = $region5
  $region4: #{prenet_forward.1} parent=0 // pred_region
    _
  $region5: #{prenet_forward.1} parent=0 // pred_fallthru
    _
  // Predicated region
  $region6: #{prenet_forward.1} parent=0 // pred_check
    _
  $region7: #{prenet_forward.1} parent=0 // pred_check_branch
    %13 = sbr.rel (0) target = $region9
  $region8: #{prenet_forward.1} parent=0 // pred_region
    _
  $region9: #{prenet_forward.1} parent=0 // pred_fallthru
    _
  // Predicated region
  $region10: #{prenet_forward.1} parent=0 // pred_check
    _
  $region11: #{prenet_forward.1} parent=0 // pred_check_branch
    %15 = sbr.rel (0) target = $region13
  $region12: #{prenet_forward.1} parent=0 // pred_region
    _
  $region13: #{prenet_forward.1} parent=0 // pred_fallthru
    _
  // Predicated region
  $region14: #{prenet_forward.1} parent=0 // pred_check
    _
  $region15: #{prenet_forward.1} parent=0 // pred_check_branch
    %17 = sbr.rel (0) target = $region17
  $region16: #{prenet_forward.1} parent=0 // pred_region
    _
  $region17: #{prenet_forward.1} parent=0 // pred_fallthru
    _
  %s19 = sld [smem:[#allocation2]]
  %v20 = vlaneseq
  %v21 = vshrl.u32 %v20, 7
  %vm22 = vcmp.eq.s32.totalorder %v21, 4
  %v23 = vld [vmem:[%s0] sm:$0xff]
  %v24 = vld [vmem:[%s0 + $0x8] sm:$0xff]
  %v25 = vld [vmem:[%s0 + $0x10] sm:$0xff]
  %v26 = vld [vmem:[%s0 + $0x18] sm:$0xff]
  %v27 = vld [vmem:[%s1] sm:$0xff]
  %v28 = vld [vmem:[%s1 + $0x8] sm:$0xff]
  %v29 = vld [vmem:[%s1 + $0x10] sm:$0xff]
  %vm30 = vcmask 64512
  %v32 = vsel %vm30, %v27, 0
  %v35 = vsel %vm30, %v28, 0
  %v38 = vsel %vm30, %v29, 0
  %40 = vmatprep.subr.mxu0 0.0
  %41 = vmatpush1.msra.mxu0 0.0
  %42 = vmatprep.subr.mxu0 0.0
  %43 = vmatpush1.msra.mxu0 0.0
  %44 = vmatprep.subr.mxu0 0.0
  %45 = vmatpush1.msra.mxu0 0.0
  %46 = vmatprep.subr.mxu0 0.0
  %47 = vmatpush1.msra.mxu0 0.0
  %48 = vmatprep.subr.mxu0 0.0
  %49 = vmatpush1.msra.mxu0 0.0
  %50 = vmatprep.subr.mxu0 0.0
  %51 = vmatpush1.msra.mxu0 0.0
  %52 = vmatprep.subr.mxu0 0.0
  %53 = vmatpush1.msra.mxu0 0.0
  %54 = vmatprep.subr.mxu0 0.0
  %55 = vmatpush1.msra.mxu0 0.0
  %56 = vmatprep.subr.mxu0 0.0
  %57 = vmatpush1.msra.mxu0 0.0
  %58 = vmatprep.subr.mxu0 0.0
  %59 = vmatpush1.msra.mxu0 0.0
  %60 = vmatprep.subr.mxu0 0.0
  %61 = vmatpush1.msra.mxu0 0.0
  %62 = vmatprep.subr.mxu0 0.0
  %63 = vmatpush1.msra.mxu0 0.0
  %64 = vmatprep.subr.mxu0 0.0
  %65 = vmatpush1.msra.mxu0 0.0
  %66 = vmatprep.subr.mxu0 0.0
  %67 = vmatpush1.msra.mxu0 0.0
  %68 = vmatprep.subr.mxu0 0.0
  %69 = vmatpush1.msra.mxu0 0.0
  %70 = vmatprep.subr.mxu0 %v24
  %71 = vmatpush1.msra.mxu0 %v23
  %72 = vmatprep.subr.mxu0 0.0
  %73 = vmatpush2.msra.mxu0 0.0
  %74 = vmatprep.subr.mxu0 0.0
  %75 = vmatpush2.msra.mxu0 0.0
  %76 = vmatprep.subr.mxu0 0.0
  %77 = vmatpush2.msra.mxu0 0.0
  %78 = vmatprep.subr.mxu0 0.0
  %79 = vmatpush2.msra.mxu0 0.0
  %80 = vmatprep.subr.mxu0 0.0
  %81 = vmatpush2.msra.mxu0 0.0
  %82 = vmatprep.subr.mxu0 0.0
  %83 = vmatpush2.msra.mxu0 0.0
  %84 = vmatprep.subr.mxu0 0.0
  %85 = vmatpush2.msra.mxu0 0.0
  %86 = vmatprep.subr.mxu0 0.0
  %87 = vmatpush2.msra.mxu0 0.0
  %88 = vmatprep.subr.mxu0 0.0
  %89 = vmatpush2.msra.mxu0 0.0
  %90 = vmatprep.subr.mxu0 0.0
  %91 = vmatpush2.msra.mxu0 0.0
  %92 = vmatprep.subr.mxu0 0.0
  %93 = vmatpush2.msra.mxu0 0.0
  %94 = vmatprep.subr.mxu0 0.0
  %95 = vmatpush2.msra.mxu0 0.0
  %96 = vmatprep.subr.mxu0 0.0
  %97 = vmatpush2.msra.mxu0 0.0
  %98 = vmatprep.subr.mxu0 0.0
  %99 = vmatpush2.msra.mxu0 0.0
  %100 = vmatprep.subr.mxu0 0.0
  %101 = vmatpush2.msra.mxu0 0.0
  %102 = vmatprep.subr.mxu0 0.0
  %103 = vmatpush2.msra.mxu0 0.0
  %104 = vmatprep.mubr.f32.mxu0 0.0
  %105 = vmatmul.mubr.f32.gmra.mxu0 %v32
  %v106 = vpop.f32.mrf.mxu0
  %v107 = vadd.f32 0.0, %v106
  %v108 = vpop.f32.mrf.mxu0
  %v109 = vadd.f32 0.0, %v108
  %110 = vmatprep.mubr.f32.mxu0 0.0
  %111 = vmatmul.mubr.f32.gmra.mxu0 %v35
  %v112 = vpop.f32.mrf.mxu0
  %v113 = vadd.f32 0.0, %v112
  %v114 = vpop.f32.mrf.mxu0
  %v115 = vadd.f32 0.0, %v114
  %116 = vmatprep.mubr.f32.mxu0 0.0
  %117 = vmatmul.mubr.f32.gmra.mxu0 %v38
  %v118 = vpop.f32.mrf.mxu0
  %v119 = vadd.f32 0.0, %v118
  %v120 = vpop.f32.mrf.mxu0
  %v121 = vadd.f32 0.0, %v120
  %122 = vdwg.mxu0
  %123 = vmatprep.subr.mxu0 0.0
  %124 = vmatpush1.msra.mxu0 0.0
  %125 = vmatprep.subr.mxu0 0.0
  %126 = vmatpush1.msra.mxu0 0.0
  %127 = vmatprep.subr.mxu0 0.0
  %128 = vmatpush1.msra.mxu0 0.0
  %129 = vmatprep.subr.mxu0 0.0
  %130 = vmatpush1.msra.mxu0 0.0
  %131 = vmatprep.subr.mxu0 0.0
  %132 = vmatpush1.msra.mxu0 0.0
  %133 = vmatprep.subr.mxu0 0.0
  %134 = vmatpush1.msra.mxu0 0.0
  %135 = vmatprep.subr.mxu0 0.0
  %136 = vmatpush1.msra.mxu0 0.0
  %137 = vmatprep.subr.mxu0 0.0
  %138 = vmatpush1.msra.mxu0 0.0
  %139 = vmatprep.subr.mxu0 0.0
  %140 = vmatpush1.msra.mxu0 0.0
  %141 = vmatprep.subr.mxu0 0.0
  %142 = vmatpush1.msra.mxu0 0.0
  %143 = vmatprep.subr.mxu0 0.0
  %144 = vmatpush1.msra.mxu0 0.0
  %145 = vmatprep.subr.mxu0 0.0
  %146 = vmatpush1.msra.mxu0 0.0
  %147 = vmatprep.subr.mxu0 0.0
  %148 = vmatpush1.msra.mxu0 0.0
  %149 = vmatprep.subr.mxu0 0.0
  %150 = vmatpush1.msra.mxu0 0.0
  %151 = vmatprep.subr.mxu0 0.0
  %152 = vmatpush1.msra.mxu0 0.0
  %153 = vmatprep.subr.mxu0 %v26
  %154 = vmatpush1.msra.mxu0 %v25
  %155 = vmatprep.subr.mxu0 0.0
  %156 = vmatpush2.msra.mxu0 0.0
  %157 = vmatprep.subr.mxu0 0.0
  %158 = vmatpush2.msra.mxu0 0.0
  %159 = vmatprep.subr.mxu0 0.0
  %160 = vmatpush2.msra.mxu0 0.0
  %161 = vmatprep.subr.mxu0 0.0
  %162 = vmatpush2.msra.mxu0 0.0
  %163 = vmatprep.subr.mxu0 0.0
  %164 = vmatpush2.msra.mxu0 0.0
  %165 = vmatprep.subr.mxu0 0.0
  %166 = vmatpush2.msra.mxu0 0.0
  %167 = vmatprep.subr.mxu0 0.0
  %168 = vmatpush2.msra.mxu0 0.0
  %169 = vmatprep.subr.mxu0 0.0
  %170 = vmatpush2.msra.mxu0 0.0
  %171 = vmatprep.subr.mxu0 0.0
  %172 = vmatpush2.msra.mxu0 0.0
  %173 = vmatprep.subr.mxu0 0.0
  %174 = vmatpush2.msra.mxu0 0.0
  %175 = vmatprep.subr.mxu0 0.0
  %176 = vmatpush2.msra.mxu0 0.0
  %177 = vmatprep.subr.mxu0 0.0
  %178 = vmatpush2.msra.mxu0 0.0
  %179 = vmatprep.subr.mxu0 0.0
  %180 = vmatpush2.msra.mxu0 0.0
  %181 = vmatprep.subr.mxu0 0.0
  %182 = vmatpush2.msra.mxu0 0.0
  %183 = vmatprep.subr.mxu0 0.0
  %184 = vmatpush2.msra.mxu0 0.0
  %185 = vmatprep.subr.mxu0 0.0
  %186 = vmatpush2.msra.mxu0 0.0
  %187 = vmatprep.mubr.f32.mxu0 0.0
  %188 = vmatmul.mubr.f32.gmra.mxu0 %v32
  %v189 = vpop.f32.mrf.mxu0
  %v190 = vadd.f32 0.0, %v189
  %v191 = vpop.f32.mrf.mxu0
  %v192 = vadd.f32 0.0, %v191
  %193 = vmatprep.mubr.f32.mxu0 0.0
  %194 = vmatmul.mubr.f32.gmra.mxu0 %v35
  %v195 = vpop.f32.mrf.mxu0
  %v196 = vadd.f32 0.0, %v195
  %v197 = vpop.f32.mrf.mxu0
  %v198 = vadd.f32 0.0, %v197
  %199 = vmatprep.mubr.f32.mxu0 0.0
  %200 = vmatmul.mubr.f32.gmra.mxu0 %v38
  %v201 = vpop.f32.mrf.mxu0
  %v202 = vadd.f32 0.0, %v201
  %v203 = vpop.f32.mrf.mxu0
  %v204 = vadd.f32 0.0, %v203
  %205 = vdwg.mxu0
  %v206 = vpack.c.bf16 %v107, %v107
  %v207 = vpack.c.bf16 %v109, %v109
  %v208 = vpack.c.bf16 %v113, %v113
  %v209 = vpack.c.bf16 %v115, %v115
  %v210 = vsel %vm22, 1.0, %v119
  %v211 = vsel %vm22, 1.0, %v121
  %v212 = vpack.c.bf16 %v210, %v210
  %v213 = vpack.c.bf16 %v211, %v211
  %214 = vxpose.xlu0.c.b16.start [1/8] %v208, 128
  %215 = vxpose.xlu0.c.b16.cont [2/8] 0, 128
  %216 = vxpose.xlu0.c.b16.cont [3/8] 0, 128
  %217 = vxpose.xlu0.c.b16.cont [4/8] 0, 128
  %218 = vxpose.xlu0.c.b16.cont [5/8] 0, 128
  %219 = vxpose.xlu0.c.b16.cont [6/8] 0, 128
  %220 = vxpose.xlu0.c.b16.cont [7/8] 0, 128
  %221 = vxpose.xlu0.c.b16.end [8/8] 0, 128
  %v222 = vpop.trf.xlu0
  %v223 = vpop.trf.xlu0
  %v224 = vpop.trf.xlu0
  %v225 = vpop.trf.xlu0
  %v226 = vpop.trf.xlu0
  %v227 = vpop.trf.xlu0
  %v228 = vpop.trf.xlu0
  %v229 = vpop.trf.xlu0
  %230 = vxpose.xlu0.c.b16.start [1/8] %v209, 128
  %231 = vxpose.xlu0.c.b16.cont [2/8] 0, 128
  %232 = vxpose.xlu0.c.b16.cont [3/8] 0, 128
  %233 = vxpose.xlu0.c.b16.cont [4/8] 0, 128
  %234 = vxpose.xlu0.c.b16.cont [5/8] 0, 128
  %235 = vxpose.xlu0.c.b16.cont [6/8] 0, 128
  %236 = vxpose.xlu0.c.b16.cont [7/8] 0, 128
  %237 = vxpose.xlu0.c.b16.end [8/8] 0, 128
  %v238 = vpop.trf.xlu0
  %v239 = vpop.trf.xlu0
  %v240 = vpop.trf.xlu0
  %v241 = vpop.trf.xlu0
  %v242 = vpop.trf.xlu0
  %v243 = vpop.trf.xlu0
  %v244 = vpop.trf.xlu0
  %v245 = vpop.trf.xlu0
  %v247 = vsel %vm30, %v222, 0
  %v250 = vsel %vm30, %v223, 0
  %v253 = vsel %vm30, %v224, 0
  %v256 = vsel %vm30, %v225, 0
  %v259 = vsel %vm30, %v226, 0
  %v262 = vsel %vm30, %v227, 0
  %v265 = vsel %vm30, %v228, 0
  %v268 = vsel %vm30, %v229, 0
  %v271 = vsel %vm30, %v238, 0
  %v274 = vsel %vm30, %v239, 0
  %v277 = vsel %vm30, %v240, 0
  %v280 = vsel %vm30, %v241, 0
  %v283 = vsel %vm30, %v242, 0
  %v286 = vsel %vm30, %v243, 0
  %v289 = vsel %vm30, %v244, 0
  %v292 = vsel %vm30, %v245, 0
  %vm294 = vcmask 1043456
  %v296 = vsel %vm294, %v206, 0
  %v299 = vsel %vm294, %v207, 0
  %301 = vmatprep.subr.bf16.mxu0 0
  %302 = vmatpush1.bf16.msra.mxu0 0
  %303 = vmatprep.subr.bf16.mxu0 0
  %304 = vmatpush1.bf16.msra.mxu0 0
  %305 = vmatprep.subr.bf16.mxu0 0
  %306 = vmatpush1.bf16.msra.mxu0 0
  %307 = vmatprep.subr.bf16.mxu0 0
  %308 = vmatpush1.bf16.msra.mxu0 0
  %309 = vmatprep.subr.bf16.mxu0 0
  %310 = vmatpush1.bf16.msra.mxu0 0
  %311 = vmatprep.subr.bf16.mxu0 0
  %312 = vmatpush1.bf16.msra.mxu0 0
  %313 = vmatprep.subr.bf16.mxu0 0
  %314 = vmatpush1.bf16.msra.mxu0 0
  %315 = vmatprep.subr.bf16.mxu0 %v299
  %316 = vmatpush1.bf16.msra.mxu0 %v296
  %317 = vmatprep.subr.bf16.mxu0 0
  %318 = vmatpush2.bf16.msra.mxu0 0
  %319 = vmatprep.subr.bf16.mxu0 0
  %320 = vmatpush2.bf16.msra.mxu0 0
  %321 = vmatprep.subr.bf16.mxu0 0
  %322 = vmatpush2.bf16.msra.mxu0 0
  %323 = vmatprep.subr.bf16.mxu0 0
  %324 = vmatpush2.bf16.msra.mxu0 0
  %325 = vmatprep.subr.bf16.mxu0 0
  %326 = vmatpush2.bf16.msra.mxu0 0
  %327 = vmatprep.subr.bf16.mxu0 0
  %328 = vmatpush2.bf16.msra.mxu0 0
  %329 = vmatprep.subr.bf16.mxu0 0
  %330 = vmatpush2.bf16.msra.mxu0 0
  %331 = vmatprep.subr.bf16.mxu0 0
  %332 = vmatpush2.bf16.msra.mxu0 0
  %333 = vmatprep.mubr.bf16.mxu0 0
  %334 = vmatmul.mubr.bf16.gmra.mxu0 %v247
  %v335 = vpop.f32.mrf.mxu0
  %v336 = vadd.f32 0.0, %v335
  %v337 = vpop.f32.mrf.mxu0
  %v338 = vadd.f32 0.0, %v337
  %v339 = vpop.f32.mrf.mxu0
  %v340 = vadd.f32 0.0, %v339
  %v341 = vpop.f32.mrf.mxu0
  %v342 = vadd.f32 0.0, %v341
  %343 = vmatprep.mubr.bf16.mxu0 0
  %344 = vmatmul.mubr.bf16.gmra.mxu0 %v250
  %v345 = vpop.f32.mrf.mxu0
  %v346 = vadd.f32 0.0, %v345
  %v347 = vpop.f32.mrf.mxu0
  %v348 = vadd.f32 0.0, %v347
  %v349 = vpop.f32.mrf.mxu0
  %v350 = vadd.f32 0.0, %v349
  %v351 = vpop.f32.mrf.mxu0
  %v352 = vadd.f32 0.0, %v351
  %353 = vmatprep.mubr.bf16.mxu0 0
  %354 = vmatmul.mubr.bf16.gmra.mxu0 %v253
  %v355 = vpop.f32.mrf.mxu0
  %v356 = vadd.f32 0.0, %v355
  %v357 = vpop.f32.mrf.mxu0
  %v358 = vadd.f32 0.0, %v357
  %v359 = vpop.f32.mrf.mxu0
  %v360 = vadd.f32 0.0, %v359
  %v361 = vpop.f32.mrf.mxu0
  %v362 = vadd.f32 0.0, %v361
  %363 = vmatprep.mubr.bf16.mxu0 0
  %364 = vmatmul.mubr.bf16.gmra.mxu0 %v256
  %v365 = vpop.f32.mrf.mxu0
  %v366 = vadd.f32 0.0, %v365
  %v367 = vpop.f32.mrf.mxu0
  %v368 = vadd.f32 0.0, %v367
  %v369 = vpop.f32.mrf.mxu0
  %v370 = vadd.f32 0.0, %v369
  %v371 = vpop.f32.mrf.mxu0
  %v372 = vadd.f32 0.0, %v371
  %373 = vmatprep.mubr.bf16.mxu0 0
  %374 = vmatmul.mubr.bf16.gmra.mxu0 %v259
  %v375 = vpop.f32.mrf.mxu0
  %v376 = vadd.f32 0.0, %v375
  %v377 = vpop.f32.mrf.mxu0
  %v378 = vadd.f32 0.0, %v377
  %v379 = vpop.f32.mrf.mxu0
  %v380 = vadd.f32 0.0, %v379
  %v381 = vpop.f32.mrf.mxu0
  %v382 = vadd.f32 0.0, %v381
  %383 = vmatprep.mubr.bf16.mxu0 0
  %384 = vmatmul.mubr.bf16.gmra.mxu0 %v262
  %v385 = vpop.f32.mrf.mxu0
  %v386 = vadd.f32 0.0, %v385
  %v387 = vpop.f32.mrf.mxu0
  %v388 = vadd.f32 0.0, %v387
  %v389 = vpop.f32.mrf.mxu0
  %v390 = vadd.f32 0.0, %v389
  %v391 = vpop.f32.mrf.mxu0
  %v392 = vadd.f32 0.0, %v391
  %393 = vmatprep.mubr.bf16.mxu0 0
  %394 = vmatmul.mubr.bf16.gmra.mxu0 %v265
  %v395 = vpop.f32.mrf.mxu0
  %v396 = vadd.f32 0.0, %v395
  %v397 = vpop.f32.mrf.mxu0
  %v398 = vadd.f32 0.0, %v397
  %v399 = vpop.f32.mrf.mxu0
  %v400 = vadd.f32 0.0, %v399
  %v401 = vpop.f32.mrf.mxu0
  %v402 = vadd.f32 0.0, %v401
  %403 = vmatprep.mubr.bf16.mxu0 0
  %404 = vmatmul.mubr.bf16.gmra.mxu0 %v268
  %v405 = vpop.f32.mrf.mxu0
  %v406 = vadd.f32 0.0, %v405
  %v407 = vpop.f32.mrf.mxu0
  %v408 = vadd.f32 0.0, %v407
  %v409 = vpop.f32.mrf.mxu0
  %v410 = vadd.f32 0.0, %v409
  %v411 = vpop.f32.mrf.mxu0
  %v412 = vadd.f32 0.0, %v411
  %413 = vmatprep.mubr.bf16.mxu0 0
  %414 = vmatmul.mubr.bf16.gmra.mxu0 %v271
  %v415 = vpop.f32.mrf.mxu0
  %v416 = vadd.f32 0.0, %v415
  %v417 = vpop.f32.mrf.mxu0
  %v418 = vadd.f32 0.0, %v417
  %v419 = vpop.f32.mrf.mxu0
  %v420 = vadd.f32 0.0, %v419
  %v421 = vpop.f32.mrf.mxu0
  %v422 = vadd.f32 0.0, %v421
  %423 = vmatprep.mubr.bf16.mxu0 0
  %424 = vmatmul.mubr.bf16.gmra.mxu0 %v274
  %v425 = vpop.f32.mrf.mxu0
  %v426 = vadd.f32 0.0, %v425
  %v427 = vpop.f32.mrf.mxu0
  %v428 = vadd.f32 0.0, %v427
  %v429 = vpop.f32.mrf.mxu0
  %v430 = vadd.f32 0.0, %v429
  %v431 = vpop.f32.mrf.mxu0
  %v432 = vadd.f32 0.0, %v431
  %433 = vmatprep.mubr.bf16.mxu0 0
  %434 = vmatmul.mubr.bf16.gmra.mxu0 %v277
  %v435 = vpop.f32.mrf.mxu0
  %v436 = vadd.f32 0.0, %v435
  %v437 = vpop.f32.mrf.mxu0
  %v438 = vadd.f32 0.0, %v437
  %v439 = vpop.f32.mrf.mxu0
  %v440 = vadd.f32 0.0, %v439
  %v441 = vpop.f32.mrf.mxu0
  %v442 = vadd.f32 0.0, %v441
  %443 = vmatprep.mubr.bf16.mxu0 0
  %444 = vmatmul.mubr.bf16.gmra.mxu0 %v280
  %v445 = vpop.f32.mrf.mxu0
  %v446 = vadd.f32 0.0, %v445
  %v447 = vpop.f32.mrf.mxu0
  %v448 = vadd.f32 0.0, %v447
  %v449 = vpop.f32.mrf.mxu0
  %v450 = vadd.f32 0.0, %v449
  %v451 = vpop.f32.mrf.mxu0
  %v452 = vadd.f32 0.0, %v451
  %453 = vmatprep.mubr.bf16.mxu0 0
  %454 = vmatmul.mubr.bf16.gmra.mxu0 %v283
  %v455 = vpop.f32.mrf.mxu0
  %v456 = vadd.f32 0.0, %v455
  %v457 = vpop.f32.mrf.mxu0
  %v458 = vadd.f32 0.0, %v457
  %v459 = vpop.f32.mrf.mxu0
  %v460 = vadd.f32 0.0, %v459
  %v461 = vpop.f32.mrf.mxu0
  %v462 = vadd.f32 0.0, %v461
  %463 = vmatprep.mubr.bf16.mxu0 0
  %464 = vmatmul.mubr.bf16.gmra.mxu0 %v286
  %v465 = vpop.f32.mrf.mxu0
  %v466 = vadd.f32 0.0, %v465
  %v467 = vpop.f32.mrf.mxu0
  %v468 = vadd.f32 0.0, %v467
  %v469 = vpop.f32.mrf.mxu0
  %v470 = vadd.f32 0.0, %v469
  %v471 = vpop.f32.mrf.mxu0
  %v472 = vadd.f32 0.0, %v471
  %473 = vmatprep.mubr.bf16.mxu0 0
  %474 = vmatmul.mubr.bf16.gmra.mxu0 %v289
  %v475 = vpop.f32.mrf.mxu0
  %v476 = vadd.f32 0.0, %v475
  %v477 = vpop.f32.mrf.mxu0
  %v478 = vadd.f32 0.0, %v477
  %v479 = vpop.f32.mrf.mxu0
  %v480 = vadd.f32 0.0, %v479
  %v481 = vpop.f32.mrf.mxu0
  %v482 = vadd.f32 0.0, %v481
  %483 = vmatprep.mubr.bf16.mxu0 0
  %484 = vmatmul.mubr.bf16.gmra.mxu0 %v292
  %v485 = vpop.f32.mrf.mxu0
  %v486 = vadd.f32 0.0, %v485
  %v487 = vpop.f32.mrf.mxu0
  %v488 = vadd.f32 0.0, %v487
  %v489 = vpop.f32.mrf.mxu0
  %v490 = vadd.f32 0.0, %v489
  %v491 = vpop.f32.mrf.mxu0
  %v492 = vadd.f32 0.0, %v491
  %493 = vdwg.mxu0
  %v494 = vmax.f32 %v336, %v346
  %v495 = vmax.f32 %v340, %v350
  %v496 = vmax.f32 %v494, %v356
  %v497 = vmax.f32 %v495, %v360
  %v498 = vmax.f32 %v496, %v366
  %v499 = vmax.f32 %v497, %v370
  %v500 = vmax.f32 %v498, %v376
  %v501 = vmax.f32 %v499, %v380
  %v502 = vmax.f32 %v500, %v386
  %v503 = vmax.f32 %v501, %v390
  %v504 = vmax.f32 %v502, %v396
  %v505 = vmax.f32 %v503, %v400
  %v506 = vmax.f32 %v504, %v406
  %v507 = vmax.f32 %v505, %v410
  %v508 = vmax.f32 %v506, %v416
  %v509 = vmax.f32 %v507, %v420
  %v510 = vmax.f32 %v508, %v426
  %v511 = vmax.f32 %v509, %v430
  %v512 = vmax.f32 %v510, %v436
  %v513 = vmax.f32 %v511, %v440
  %v514 = vmax.f32 %v512, %v446
  %v515 = vmax.f32 %v513, %v450
  %v516 = vmax.f32 %v514, %v456
  %v517 = vmax.f32 %v515, %v460
  %v518 = vmax.f32 %v516, %v466
  %v519 = vmax.f32 %v517, %v470
  %v520 = vmax.f32 %v518, %v476
  %v521 = vmax.f32 %v519, %v480
  %v522 = vmax.f32 %v520, %v486
  %v523 = vmax.f32 %v521, %v490
  %v524 = vmax.f32 %v522, %v523
  %v525 = vrot.slane %v524, 4
  %v526 = vmax.f32 %v524, %v525
  %v527 = vrot.slane %v526, 2
  %v528 = vmax.f32 %v526, %v527
  %v529 = vrot.slane %v528, 1
  %v530 = vmax.f32 %v528, %v529
  %v531 = vmax.f32 %v338, %v348
  %v532 = vmax.f32 %v342, %v352
  %v533 = vmax.f32 %v531, %v358
  %v534 = vmax.f32 %v532, %v362
  %v535 = vmax.f32 %v533, %v368
  %v536 = vmax.f32 %v534, %v372
  %v537 = vmax.f32 %v535, %v378
  %v538 = vmax.f32 %v536, %v382
  %v539 = vmax.f32 %v537, %v388
  %v540 = vmax.f32 %v538, %v392
  %v541 = vmax.f32 %v539, %v398
  %v542 = vmax.f32 %v540, %v402
  %v543 = vmax.f32 %v541, %v408
  %v544 = vmax.f32 %v542, %v412
  %v545 = vmax.f32 %v543, %v418
  %v546 = vmax.f32 %v544, %v422
  %v547 = vmax.f32 %v545, %v428
  %v548 = vmax.f32 %v546, %v432
  %v549 = vmax.f32 %v547, %v438
  %v550 = vmax.f32 %v548, %v442
  %v551 = vmax.f32 %v549, %v448
  %v552 = vmax.f32 %v550, %v452
  %v553 = vmax.f32 %v551, %v458
  %v554 = vmax.f32 %v552, %v462
  %v555 = vmax.f32 %v553, %v468
  %v556 = vmax.f32 %v554, %v472
  %v557 = vmax.f32 %v555, %v478
  %v558 = vmax.f32 %v556, %v482
  %v559 = vmax.f32 %v557, %v488
  %v560 = vmax.f32 %v558, %v492
  %v561 = vmax.f32 %v559, %v560
  %v562 = vrot.slane %v561, 4
  %v563 = vmax.f32 %v561, %v562
  %v564 = vrot.slane %v563, 2
  %v565 = vmax.f32 %v563, %v564
  %v566 = vrot.slane %v565, 1
  %v567 = vmax.f32 %v565, %v566
  %v568 = vsub.f32 %v336, %v530
  %v569 = vsub.f32 %v338, %v567
  %v570 = vsub.f32 %v340, %v530
  %v571 = vsub.f32 %v342, %v567
  %v572 = vsub.f32 %v346, %v530
  %v573 = vsub.f32 %v348, %v567
  %v574 = vsub.f32 %v350, %v530
  %v575 = vsub.f32 %v352, %v567
  %v576 = vsub.f32 %v356, %v530
  %v577 = vsub.f32 %v358, %v567
  %v578 = vsub.f32 %v360, %v530
  %v579 = vsub.f32 %v362, %v567
  %v580 = vsub.f32 %v366, %v530
  %v581 = vsub.f32 %v368, %v567
  %v582 = vsub.f32 %v370, %v530
  %v583 = vsub.f32 %v372, %v567
  %v584 = vsub.f32 %v376, %v530
  %v585 = vsub.f32 %v378, %v567
  %v586 = vsub.f32 %v380, %v530
  %v587 = vsub.f32 %v382, %v567
  %v588 = vsub.f32 %v386, %v530
  %v589 = vsub.f32 %v388, %v567
  %v590 = vsub.f32 %v390, %v530
  %v591 = vsub.f32 %v392, %v567
  %v592 = vsub.f32 %v396, %v530
  %v593 = vsub.f32 %v398, %v567
  %v594 = vsub.f32 %v400, %v530
  %v595 = vsub.f32 %v402, %v567
  %v596 = vsub.f32 %v406, %v530
  %v597 = vsub.f32 %v408, %v567
  %v598 = vsub.f32 %v410, %v530
  %v599 = vsub.f32 %v412, %v567
  %v600 = vsub.f32 %v416, %v530
  %v601 = vsub.f32 %v418, %v567
  %v602 = vsub.f32 %v420, %v530
  %v603 = vsub.f32 %v422, %v567
  %v604 = vsub.f32 %v426, %v530
  %v605 = vsub.f32 %v428, %v567
  %v606 = vsub.f32 %v430, %v530
  %v607 = vsub.f32 %v432, %v567
  %v608 = vsub.f32 %v436, %v530
  %v609 = vsub.f32 %v438, %v567
  %v610 = vsub.f32 %v440, %v530
  %v611 = vsub.f32 %v442, %v567
  %v612 = vsub.f32 %v446, %v530
  %v613 = vsub.f32 %v448, %v567
  %v614 = vsub.f32 %v450, %v530
  %v615 = vsub.f32 %v452, %v567
  %v616 = vsub.f32 %v456, %v530
  %v617 = vsub.f32 %v458, %v567
  %v618 = vsub.f32 %v460, %v530
  %v619 = vsub.f32 %v462, %v567
  %v620 = vsub.f32 %v466, %v530
  %v621 = vsub.f32 %v468, %v567
  %v622 = vsub.f32 %v470, %v530
  %v623 = vsub.f32 %v472, %v567
  %v624 = vsub.f32 %v476, %v530
  %v625 = vsub.f32 %v478, %v567
  %v626 = vsub.f32 %v480, %v530
  %v627 = vsub.f32 %v482, %v567
  %v628 = vsub.f32 %v486, %v530
  %v629 = vsub.f32 %v488, %v567
  %v630 = vsub.f32 %v490, %v530
  %v631 = vsub.f32 %v492, %v567
  %v632 = vmul.f32 %v568, 1.442695
  %v633 = vpow.pop %v632
  %v634 = vmul.f32 %v569, 1.442695
  %v635 = vpow.pop %v634
  %v636 = vmul.f32 %v570, 1.442695
  %v637 = vpow.pop %v636
  %v638 = vmul.f32 %v571, 1.442695
  %v639 = vpow.pop %v638
  %v640 = vmul.f32 %v572, 1.442695
  %v641 = vpow.pop %v640
  %v642 = vmul.f32 %v573, 1.442695
  %v643 = vpow.pop %v642
  %v644 = vmul.f32 %v574, 1.442695
  %v645 = vpow.pop %v644
  %v646 = vmul.f32 %v575, 1.442695
  %v647 = vpow.pop %v646
  %v648 = vmul.f32 %v576, 1.442695
  %v649 = vpow.pop %v648
  %v650 = vmul.f32 %v577, 1.442695
  %v651 = vpow.pop %v650
  %v652 = vmul.f32 %v578, 1.442695
  %v653 = vpow.pop %v652
  %v654 = vmul.f32 %v579, 1.442695
  %v655 = vpow.pop %v654
  %v656 = vmul.f32 %v580, 1.442695
  %v657 = vpow.pop %v656
  %v658 = vmul.f32 %v581, 1.442695
  %v659 = vpow.pop %v658
  %v660 = vmul.f32 %v582, 1.442695
  %v661 = vpow.pop %v660
  %v662 = vmul.f32 %v583, 1.442695
  %v663 = vpow.pop %v662
  %v664 = vmul.f32 %v584, 1.442695
  %v665 = vpow.pop %v664
  %v666 = vmul.f32 %v585, 1.442695
  %v667 = vpow.pop %v666
  %v668 = vmul.f32 %v586, 1.442695
  %v669 = vpow.pop %v668
  %v670 = vmul.f32 %v587, 1.442695
  %v671 = vpow.pop %v670
  %v672 = vmul.f32 %v588, 1.442695
  %v673 = vpow.pop %v672
  %v674 = vmul.f32 %v589, 1.442695
  %v675 = vpow.pop %v674
  %v676 = vmul.f32 %v590, 1.442695
  %v677 = vpow.pop %v676
  %v678 = vmul.f32 %v591, 1.442695
  %v679 = vpow.pop %v678
  %v680 = vmul.f32 %v592, 1.442695
  %v681 = vpow.pop %v680
  %v682 = vmul.f32 %v593, 1.442695
  %v683 = vpow.pop %v682
  %v684 = vmul.f32 %v594, 1.442695
  %v685 = vpow.pop %v684
  %v686 = vmul.f32 %v595, 1.442695
  %v687 = vpow.pop %v686
  %v688 = vmul.f32 %v596, 1.442695
  %v689 = vpow.pop %v688
  %v690 = vmul.f32 %v597, 1.442695
  %v691 = vpow.pop %v690
  %v692 = vmul.f32 %v598, 1.442695
  %v693 = vpow.pop %v692
  %v694 = vmul.f32 %v599, 1.442695
  %v695 = vpow.pop %v694
  %v696 = vmul.f32 %v600, 1.442695
  %v697 = vpow.pop %v696
  %v698 = vmul.f32 %v601, 1.442695
  %v699 = vpow.pop %v698
  %v700 = vmul.f32 %v602, 1.442695
  %v701 = vpow.pop %v700
  %v702 = vmul.f32 %v603, 1.442695
  %v703 = vpow.pop %v702
  %v704 = vmul.f32 %v604, 1.442695
  %v705 = vpow.pop %v704
  %v706 = vmul.f32 %v605, 1.442695
  %v707 = vpow.pop %v706
  %v708 = vmul.f32 %v606, 1.442695
  %v709 = vpow.pop %v708
  %v710 = vmul.f32 %v607, 1.442695
  %v711 = vpow.pop %v710
  %v712 = vmul.f32 %v608, 1.442695
  %v713 = vpow.pop %v712
  %v714 = vmul.f32 %v609, 1.442695
  %v715 = vpow.pop %v714
  %v716 = vmul.f32 %v610, 1.442695
  %v717 = vpow.pop %v716
  %v718 = vmul.f32 %v611, 1.442695
  %v719 = vpow.pop %v718
  %v720 = vmul.f32 %v612, 1.442695
  %v721 = vpow.pop %v720
  %v722 = vmul.f32 %v613, 1.442695
  %v723 = vpow.pop %v722
  %v724 = vmul.f32 %v614, 1.442695
  %v725 = vpow.pop %v724
  %v726 = vmul.f32 %v615, 1.442695
  %v727 = vpow.pop %v726
  %v728 = vmul.f32 %v616, 1.442695
  %v729 = vpow.pop %v728
  %v730 = vmul.f32 %v617, 1.442695
  %v731 = vpow.pop %v730
  %v732 = vmul.f32 %v618, 1.442695
  %v733 = vpow.pop %v732
  %v734 = vmul.f32 %v619, 1.442695
  %v735 = vpow.pop %v734
  %v736 = vmul.f32 %v620, 1.442695
  %v737 = vpow.pop %v736
  %v738 = vmul.f32 %v621, 1.442695
  %v739 = vpow.pop %v738
  %v740 = vmul.f32 %v622, 1.442695
  %v741 = vpow.pop %v740
  %v742 = vmul.f32 %v623, 1.442695
  %v743 = vpow.pop %v742
  %v744 = vmul.f32 %v624, 1.442695
  %v745 = vpow.pop %v744
  %v746 = vmul.f32 %v625, 1.442695
  %v747 = vpow.pop %v746
  %v748 = vmul.f32 %v626, 1.442695
  %v749 = vpow.pop %v748
  %v750 = vmul.f32 %v627, 1.442695
  %v751 = vpow.pop %v750
  %v752 = vmul.f32 %v628, 1.442695
  %v753 = vpow.pop %v752
  %v754 = vmul.f32 %v629, 1.442695
  %v755 = vpow.pop %v754
  %v756 = vmul.f32 %v630, 1.442695
  %v757 = vpow.pop %v756
  %v758 = vmul.f32 %v631, 1.442695
  %v759 = vpow.pop %v758
  %v760 = vpack.c.bf16 %v637, %v633
  %v761 = vpack.c.bf16 %v639, %v635
  %v762 = vpack.c.bf16 %v645, %v641
  %v763 = vpack.c.bf16 %v647, %v643
  %v764 = vpack.c.bf16 %v653, %v649
  %v765 = vpack.c.bf16 %v655, %v651
  %v766 = vpack.c.bf16 %v661, %v657
  %v767 = vpack.c.bf16 %v663, %v659
  %v768 = vpack.c.bf16 %v669, %v665
  %v769 = vpack.c.bf16 %v671, %v667
  %v770 = vpack.c.bf16 %v677, %v673
  %v771 = vpack.c.bf16 %v679, %v675
  %v772 = vpack.c.bf16 %v685, %v681
  %v773 = vpack.c.bf16 %v687, %v683
  %v774 = vpack.c.bf16 %v693, %v689
  %v775 = vpack.c.bf16 %v695, %v691
  %v776 = vpack.c.bf16 %v701, %v697
  %v777 = vpack.c.bf16 %v703, %v699
  %v778 = vpack.c.bf16 %v709, %v705
  %v779 = vpack.c.bf16 %v711, %v707
  %v780 = vpack.c.bf16 %v717, %v713
  %v781 = vpack.c.bf16 %v719, %v715
  %v782 = vpack.c.bf16 %v725, %v721
  %v783 = vpack.c.bf16 %v727, %v723
  %v784 = vpack.c.bf16 %v733, %v729
  %v785 = vpack.c.bf16 %v735, %v731
  %v786 = vpack.c.bf16 %v741, %v737
  %v787 = vpack.c.bf16 %v743, %v739
  %v788 = vpack.c.bf16 %v749, %v745
  %v789 = vpack.c.bf16 %v751, %v747
  %v790 = vpack.c.bf16 %v757, %v753
  %v791 = vpack.c.bf16 %v759, %v755
  %792 = vmatprep.subr.bf16.mxu0 %v775
  %793 = vmatpush1.bf16.msra.mxu0 %v774
  %794 = vmatprep.subr.bf16.mxu0 %v773
  %795 = vmatpush1.bf16.msra.mxu0 %v772
  %796 = vmatprep.subr.bf16.mxu0 %v771
  %797 = vmatpush1.bf16.msra.mxu0 %v770
  %798 = vmatprep.subr.bf16.mxu0 %v769
  %799 = vmatpush1.bf16.msra.mxu0 %v768
  %800 = vmatprep.subr.bf16.mxu0 %v767
  %801 = vmatpush1.bf16.msra.mxu0 %v766
  %802 = vmatprep.subr.bf16.mxu0 %v765
  %803 = vmatpush1.bf16.msra.mxu0 %v764
  %804 = vmatprep.subr.bf16.mxu0 %v763
  %805 = vmatpush1.bf16.msra.mxu0 %v762
  %806 = vmatprep.subr.bf16.mxu0 %v761
  %807 = vmatpush1.bf16.msra.mxu0 %v760
  %808 = vmatprep.subr.bf16.mxu0 %v791
  %809 = vmatpush2.bf16.msra.mxu0 %v790
  %810 = vmatprep.subr.bf16.mxu0 %v789
  %811 = vmatpush2.bf16.msra.mxu0 %v788
  %812 = vmatprep.subr.bf16.mxu0 %v787
  %813 = vmatpush2.bf16.msra.mxu0 %v786
  %814 = vmatprep.subr.bf16.mxu0 %v785
  %815 = vmatpush2.bf16.msra.mxu0 %v784
  %816 = vmatprep.subr.bf16.mxu0 %v783
  %817 = vmatpush2.bf16.msra.mxu0 %v782
  %818 = vmatprep.subr.bf16.mxu0 %v781
  %819 = vmatpush2.bf16.msra.mxu0 %v780
  %820 = vmatprep.subr.bf16.mxu0 %v779
  %821 = vmatpush2.bf16.msra.mxu0 %v778
  %822 = vmatprep.subr.bf16.mxu0 %v777
  %823 = vmatpush2.bf16.msra.mxu0 %v776
  %824 = vmatprep.mubr.bf16.mxu0 %v213
  %825 = vmatmul.mubr.bf16.gmra.mxu0 %v212
  %v826 = vpop.f32.mrf.mxu0
  %v827 = vadd.f32 0.0, %v826
  %v828 = vpop.f32.mrf.mxu0
  %v829 = vadd.f32 0.0, %v828
  %v830 = vpop.f32.mrf.mxu0
  %v831 = vpop.f32.mrf.mxu0
  %832 = vdwg.mxu0
  %v833 = vrcp.pop %v827
  %v834 = vrcp.pop %v829
  %v835 = vlaneseq
  %v836 = vshrl.u32 %v835, 7
  %v837 = vsub.s32 4, %v836
  %v838 = vrot.slane %v833, %v837
  %v839 = vlaneseq
  %v840 = vshrl.u32 %v839, 7
  %v841 = vsub.s32 4, %v840
  %v842 = vrot.slane %v834, %v841
  %v843 = vmul.f32 %v827, %v838
  %v844 = vmul.f32 %v829, %v842
  %v845 = vpack.c.bf16 %v190, %v190
  %v846 = vpack.c.bf16 %v192, %v192
  %v847 = vpack.c.bf16 %v196, %v196
  %v848 = vpack.c.bf16 %v198, %v198
  %v849 = vsel %vm22, 1.0, %v202
  %v850 = vsel %vm22, 1.0, %v204
  %v851 = vpack.c.bf16 %v849, %v849
  %v852 = vpack.c.bf16 %v850, %v850
  %853 = vxpose.xlu0.c.b16.start [1/8] %v847, 128
  %854 = vxpose.xlu0.c.b16.cont [2/8] 0, 128
  %855 = vxpose.xlu0.c.b16.cont [3/8] 0, 128
  %856 = vxpose.xlu0.c.b16.cont [4/8] 0, 128
  %857 = vxpose.xlu0.c.b16.cont [5/8] 0, 128
  %858 = vxpose.xlu0.c.b16.cont [6/8] 0, 128
  %859 = vxpose.xlu0.c.b16.cont [7/8] 0, 128
  %860 = vxpose.xlu0.c.b16.end [8/8] 0, 128
  %v861 = vpop.trf.xlu0
  %v862 = vpop.trf.xlu0
  %v863 = vpop.trf.xlu0
  %v864 = vpop.trf.xlu0
  %v865 = vpop.trf.xlu0
  %v866 = vpop.trf.xlu0
  %v867 = vpop.trf.xlu0
  %v868 = vpop.trf.xlu0
  %869 = vxpose.xlu0.c.b16.start [1/8] %v848, 128
  %870 = vxpose.xlu0.c.b16.cont [2/8] 0, 128
  %871 = vxpose.xlu0.c.b16.cont [3/8] 0, 128
  %872 = vxpose.xlu0.c.b16.cont [4/8] 0, 128
  %873 = vxpose.xlu0.c.b16.cont [5/8] 0, 128
  %874 = vxpose.xlu0.c.b16.cont [6/8] 0, 128
  %875 = vxpose.xlu0.c.b16.cont [7/8] 0, 128
  %876 = vxpose.xlu0.c.b16.end [8/8] 0, 128
  %v877 = vpop.trf.xlu0
  %v878 = vpop.trf.xlu0
  %v879 = vpop.trf.xlu0
  %v880 = vpop.trf.xlu0
  %v881 = vpop.trf.xlu0
  %v882 = vpop.trf.xlu0
  %v883 = vpop.trf.xlu0
  %v884 = vpop.trf.xlu0
  %v886 = vsel %vm30, %v861, 0
  %v889 = vsel %vm30, %v862, 0
  %v892 = vsel %vm30, %v863, 0
  %v895 = vsel %vm30, %v864, 0
  %v898 = vsel %vm30, %v865, 0
  %v901 = vsel %vm30, %v866, 0
  %v904 = vsel %vm30, %v867, 0
  %v907 = vsel %vm30, %v868, 0
  %v910 = vsel %vm30, %v877, 0
  %v913 = vsel %vm30, %v878, 0
  %v916 = vsel %vm30, %v879, 0
  %v919 = vsel %vm30, %v880, 0
  %v922 = vsel %vm30, %v881, 0
  %v925 = vsel %vm30, %v882, 0
  %v928 = vsel %vm30, %v883, 0
  %v931 = vsel %vm30, %v884, 0
  %v934 = vsel %vm294, %v845, 0
  %v937 = vsel %vm294, %v846, 0
  %939 = vmatprep.subr.bf16.mxu0 0
  %940 = vmatpush1.bf16.msra.mxu0 0
  %941 = vmatprep.subr.bf16.mxu0 0
  %942 = vmatpush1.bf16.msra.mxu0 0
  %943 = vmatprep.subr.bf16.mxu0 0
  %944 = vmatpush1.bf16.msra.mxu0 0
  %945 = vmatprep.subr.bf16.mxu0 0
  %946 = vmatpush1.bf16.msra.mxu0 0
  %947 = vmatprep.subr.bf16.mxu0 0
  %948 = vmatpush1.bf16.msra.mxu0 0
  %949 = vmatprep.subr.bf16.mxu0 0
  %950 = vmatpush1.bf16.msra.mxu0 0
  %951 = vmatprep.subr.bf16.mxu0 0
  %952 = vmatpush1.bf16.msra.mxu0 0
  %953 = vmatprep.subr.bf16.mxu0 %v937
  %954 = vmatpush1.bf16.msra.mxu0 %v934
  %955 = vmatprep.subr.bf16.mxu0 0
  %956 = vmatpush2.bf16.msra.mxu0 0
  %957 = vmatprep.subr.bf16.mxu0 0
  %958 = vmatpush2.bf16.msra.mxu0 0
  %959 = vmatprep.subr.bf16.mxu0 0
  %960 = vmatpush2.bf16.msra.mxu0 0
  %961 = vmatprep.subr.bf16.mxu0 0
  %962 = vmatpush2.bf16.msra.mxu0 0
  %963 = vmatprep.subr.bf16.mxu0 0
  %964 = vmatpush2.bf16.msra.mxu0 0
  %965 = vmatprep.subr.bf16.mxu0 0
  %966 = vmatpush2.bf16.msra.mxu0 0
  %967 = vmatprep.subr.bf16.mxu0 0
  %968 = vmatpush2.bf16.msra.mxu0 0
  %969 = vmatprep.subr.bf16.mxu0 0
  %970 = vmatpush2.bf16.msra.mxu0 0
  %971 = vmatprep.mubr.bf16.mxu0 0
  %972 = vmatmul.mubr.bf16.gmra.mxu0 %v886
  %v973 = vpop.f32.mrf.mxu0
  %v974 = vadd.f32 0.0, %v973
  %v975 = vpop.f32.mrf.mxu0
  %v976 = vadd.f32 0.0, %v975
  %v977 = vpop.f32.mrf.mxu0
  %v978 = vadd.f32 0.0, %v977
  %v979 = vpop.f32.mrf.mxu0
  %v980 = vadd.f32 0.0, %v979
  %981 = vmatprep.mubr.bf16.mxu0 0
  %982 = vmatmul.mubr.bf16.gmra.mxu0 %v889
  %v983 = vpop.f32.mrf.mxu0
  %v984 = vadd.f32 0.0, %v983
  %v985 = vpop.f32.mrf.mxu0
  %v986 = vadd.f32 0.0, %v985
  %v987 = vpop.f32.mrf.mxu0
  %v988 = vadd.f32 0.0, %v987
  %v989 = vpop.f32.mrf.mxu0
  %v990 = vadd.f32 0.0, %v989
  %991 = vmatprep.mubr.bf16.mxu0 0
  %992 = vmatmul.mubr.bf16.gmra.mxu0 %v892
  %v993 = vpop.f32.mrf.mxu0
  %v994 = vadd.f32 0.0, %v993
  %v995 = vpop.f32.mrf.mxu0
  %v996 = vadd.f32 0.0, %v995
  %v997 = vpop.f32.mrf.mxu0
  %v998 = vadd.f32 0.0, %v997
  %v999 = vpop.f32.mrf.mxu0
  %v1000 = vadd.f32 0.0, %v999
  %1001 = vmatprep.mubr.bf16.mxu0 0
  %1002 = vmatmul.mubr.bf16.gmra.mxu0 %v895
  %v1003 = vpop.f32.mrf.mxu0
  %v1004 = vadd.f32 0.0, %v1003
  %v1005 = vpop.f32.mrf.mxu0
  %v1006 = vadd.f32 0.0, %v1005
  %v1007 = vpop.f32.mrf.mxu0
  %v1008 = vadd.f32 0.0, %v1007
  %v1009 = vpop.f32.mrf.mxu0
  %v1010 = vadd.f32 0.0, %v1009
  %1011 = vmatprep.mubr.bf16.mxu0 0
  %1012 = vmatmul.mubr.bf16.gmra.mxu0 %v898
  %v1013 = vpop.f32.mrf.mxu0
  %v1014 = vadd.f32 0.0, %v1013
  %v1015 = vpop.f32.mrf.mxu0
  %v1016 = vadd.f32 0.0, %v1015
  %v1017 = vpop.f32.mrf.mxu0
  %v1018 = vadd.f32 0.0, %v1017
  %v1019 = vpop.f32.mrf.mxu0
  %v1020 = vadd.f32 0.0, %v1019
  %1021 = vmatprep.mubr.bf16.mxu0 0
  %1022 = vmatmul.mubr.bf16.gmra.mxu0 %v901
  %v1023 = vpop.f32.mrf.mxu0
  %v1024 = vadd.f32 0.0, %v1023
  %v1025 = vpop.f32.mrf.mxu0
  %v1026 = vadd.f32 0.0, %v1025
  %v1027 = vpop.f32.mrf.mxu0
  %v1028 = vadd.f32 0.0, %v1027
  %v1029 = vpop.f32.mrf.mxu0
  %v1030 = vadd.f32 0.0, %v1029
  %1031 = vmatprep.mubr.bf16.mxu0 0
  %1032 = vmatmul.mubr.bf16.gmra.mxu0 %v904
  %v1033 = vpop.f32.mrf.mxu0
  %v1034 = vadd.f32 0.0, %v1033
  %v1035 = vpop.f32.mrf.mxu0
  %v1036 = vadd.f32 0.0, %v1035
  %v1037 = vpop.f32.mrf.mxu0
  %v1038 = vadd.f32 0.0, %v1037
  %v1039 = vpop.f32.mrf.mxu0
  %v1040 = vadd.f32 0.0, %v1039
  %1041 = vmatprep.mubr.bf16.mxu0 0
  %1042 = vmatmul.mubr.bf16.gmra.mxu0 %v907
  %v1043 = vpop.f32.mrf.mxu0
  %v1044 = vadd.f32 0.0, %v1043
  %v1045 = vpop.f32.mrf.mxu0
  %v1046 = vadd.f32 0.0, %v1045
  %v1047 = vpop.f32.mrf.mxu0
  %v1048 = vadd.f32 0.0, %v1047
  %v1049 = vpop.f32.mrf.mxu0
  %v1050 = vadd.f32 0.0, %v1049
  %1051 = vmatprep.mubr.bf16.mxu0 0
  %1052 = vmatmul.mubr.bf16.gmra.mxu0 %v910
  %v1053 = vpop.f32.mrf.mxu0
  %v1054 = vadd.f32 0.0, %v1053
  %v1055 = vpop.f32.mrf.mxu0
  %v1056 = vadd.f32 0.0, %v1055
  %v1057 = vpop.f32.mrf.mxu0
  %v1058 = vadd.f32 0.0, %v1057
  %v1059 = vpop.f32.mrf.mxu0
  %v1060 = vadd.f32 0.0, %v1059
  %1061 = vmatprep.mubr.bf16.mxu0 0
  %1062 = vmatmul.mubr.bf16.gmra.mxu0 %v913
  %v1063 = vpop.f32.mrf.mxu0
  %v1064 = vadd.f32 0.0, %v1063
  %v1065 = vpop.f32.mrf.mxu0
  %v1066 = vadd.f32 0.0, %v1065
  %v1067 = vpop.f32.mrf.mxu0
  %v1068 = vadd.f32 0.0, %v1067
  %v1069 = vpop.f32.mrf.mxu0
  %v1070 = vadd.f32 0.0, %v1069
  %1071 = vmatprep.mubr.bf16.mxu0 0
  %1072 = vmatmul.mubr.bf16.gmra.mxu0 %v916
  %v1073 = vpop.f32.mrf.mxu0
  %v1074 = vadd.f32 0.0, %v1073
  %v1075 = vpop.f32.mrf.mxu0
  %v1076 = vadd.f32 0.0, %v1075
  %v1077 = vpop.f32.mrf.mxu0
  %v1078 = vadd.f32 0.0, %v1077
  %v1079 = vpop.f32.mrf.mxu0
  %v1080 = vadd.f32 0.0, %v1079
  %1081 = vmatprep.mubr.bf16.mxu0 0
  %1082 = vmatmul.mubr.bf16.gmra.mxu0 %v919
  %v1083 = vpop.f32.mrf.mxu0
  %v1084 = vadd.f32 0.0, %v1083
  %v1085 = vpop.f32.mrf.mxu0
  %v1086 = vadd.f32 0.0, %v1085
  %v1087 = vpop.f32.mrf.mxu0
  %v1088 = vadd.f32 0.0, %v1087
  %v1089 = vpop.f32.mrf.mxu0
  %v1090 = vadd.f32 0.0, %v1089
  %1091 = vmatprep.mubr.bf16.mxu0 0
  %1092 = vmatmul.mubr.bf16.gmra.mxu0 %v922
  %v1093 = vpop.f32.mrf.mxu0
  %v1094 = vadd.f32 0.0, %v1093
  %v1095 = vpop.f32.mrf.mxu0
  %v1096 = vadd.f32 0.0, %v1095
  %v1097 = vpop.f32.mrf.mxu0
  %v1098 = vadd.f32 0.0, %v1097
  %v1099 = vpop.f32.mrf.mxu0
  %v1100 = vadd.f32 0.0, %v1099
  %1101 = vmatprep.mubr.bf16.mxu0 0
  %1102 = vmatmul.mubr.bf16.gmra.mxu0 %v925
  %v1103 = vpop.f32.mrf.mxu0
  %v1104 = vadd.f32 0.0, %v1103
  %v1105 = vpop.f32.mrf.mxu0
  %v1106 = vadd.f32 0.0, %v1105
  %v1107 = vpop.f32.mrf.mxu0
  %v1108 = vadd.f32 0.0, %v1107
  %v1109 = vpop.f32.mrf.mxu0
  %v1110 = vadd.f32 0.0, %v1109
  %1111 = vmatprep.mubr.bf16.mxu0 0
  %1112 = vmatmul.mubr.bf16.gmra.mxu0 %v928
  %v1113 = vpop.f32.mrf.mxu0
  %v1114 = vadd.f32 0.0, %v1113
  %v1115 = vpop.f32.mrf.mxu0
  %v1116 = vadd.f32 0.0, %v1115
  %v1117 = vpop.f32.mrf.mxu0
  %v1118 = vadd.f32 0.0, %v1117
  %v1119 = vpop.f32.mrf.mxu0
  %v1120 = vadd.f32 0.0, %v1119
  %1121 = vmatprep.mubr.bf16.mxu0 0
  %1122 = vmatmul.mubr.bf16.gmra.mxu0 %v931
  %v1123 = vpop.f32.mrf.mxu0
  %v1124 = vadd.f32 0.0, %v1123
  %v1125 = vpop.f32.mrf.mxu0
  %v1126 = vadd.f32 0.0, %v1125
  %v1127 = vpop.f32.mrf.mxu0
  %v1128 = vadd.f32 0.0, %v1127
  %v1129 = vpop.f32.mrf.mxu0
  %v1130 = vadd.f32 0.0, %v1129
  %1131 = vdwg.mxu0
  %v1132 = vmax.f32 %v974, %v984
  %v1133 = vmax.f32 %v978, %v988
  %v1134 = vmax.f32 %v1132, %v994
  %v1135 = vmax.f32 %v1133, %v998
  %v1136 = vmax.f32 %v1134, %v1004
  %v1137 = vmax.f32 %v1135, %v1008
  %v1138 = vmax.f32 %v1136, %v1014
  %v1139 = vmax.f32 %v1137, %v1018
  %v1140 = vmax.f32 %v1138, %v1024
  %v1141 = vmax.f32 %v1139, %v1028
  %v1142 = vmax.f32 %v1140, %v1034
  %v1143 = vmax.f32 %v1141, %v1038
  %v1144 = vmax.f32 %v1142, %v1044
  %v1145 = vmax.f32 %v1143, %v1048
  %v1146 = vmax.f32 %v1144, %v1054
  %v1147 = vmax.f32 %v1145, %v1058
  %v1148 = vmax.f32 %v1146, %v1064
  %v1149 = vmax.f32 %v1147, %v1068
  %v1150 = vmax.f32 %v1148, %v1074
  %v1151 = vmax.f32 %v1149, %v1078
  %v1152 = vmax.f32 %v1150, %v1084
  %v1153 = vmax.f32 %v1151, %v1088
  %v1154 = vmax.f32 %v1152, %v1094
  %v1155 = vmax.f32 %v1153, %v1098
  %v1156 = vmax.f32 %v1154, %v1104
  %v1157 = vmax.f32 %v1155, %v1108
  %v1158 = vmax.f32 %v1156, %v1114
  %v1159 = vmax.f32 %v1157, %v1118
  %v1160 = vmax.f32 %v1158, %v1124
  %v1161 = vmax.f32 %v1159, %v1128
  %v1162 = vmax.f32 %v1160, %v1161
  %v1163 = vrot.slane %v1162, 4
  %v1164 = vmax.f32 %v1162, %v1163
  %v1165 = vrot.slane %v1164, 2
  %v1166 = vmax.f32 %v1164, %v1165
  %v1167 = vrot.slane %v1166, 1
  %v1168 = vmax.f32 %v1166, %v1167
  %v1169 = vmax.f32 %v976, %v986
  %v1170 = vmax.f32 %v980, %v990
  %v1171 = vmax.f32 %v1169, %v996
  %v1172 = vmax.f32 %v1170, %v1000
  %v1173 = vmax.f32 %v1171, %v1006
  %v1174 = vmax.f32 %v1172, %v1010
  %v1175 = vmax.f32 %v1173, %v1016
  %v1176 = vmax.f32 %v1174, %v1020
  %v1177 = vmax.f32 %v1175, %v1026
  %v1178 = vmax.f32 %v1176, %v1030
  %v1179 = vmax.f32 %v1177, %v1036
  %v1180 = vmax.f32 %v1178, %v1040
  %v1181 = vmax.f32 %v1179, %v1046
  %v1182 = vmax.f32 %v1180, %v1050
  %v1183 = vmax.f32 %v1181, %v1056
  %v1184 = vmax.f32 %v1182, %v1060
  %v1185 = vmax.f32 %v1183, %v1066
  %v1186 = vmax.f32 %v1184, %v1070
  %v1187 = vmax.f32 %v1185, %v1076
  %v1188 = vmax.f32 %v1186, %v1080
  %v1189 = vmax.f32 %v1187, %v1086
  %v1190 = vmax.f32 %v1188, %v1090
  %v1191 = vmax.f32 %v1189, %v1096
  %v1192 = vmax.f32 %v1190, %v1100
  %v1193 = vmax.f32 %v1191, %v1106
  %v1194 = vmax.f32 %v1192, %v1110
  %v1195 = vmax.f32 %v1193, %v1116
  %v1196 = vmax.f32 %v1194, %v1120
  %v1197 = vmax.f32 %v1195, %v1126
  %v1198 = vmax.f32 %v1196, %v1130
  %v1199 = vmax.f32 %v1197, %v1198
  %v1200 = vrot.slane %v1199, 4
  %v1201 = vmax.f32 %v1199, %v1200
  %v1202 = vrot.slane %v1201, 2
  %v1203 = vmax.f32 %v1201, %v1202
  %v1204 = vrot.slane %v1203, 1
  %v1205 = vmax.f32 %v1203, %v1204
  %v1206 = vsub.f32 %v974, %v1168
  %v1207 = vsub.f32 %v976, %v1205
  %v1208 = vsub.f32 %v978, %v1168
  %v1209 = vsub.f32 %v980, %v1205
  %v1210 = vsub.f32 %v984, %v1168
  %v1211 = vsub.f32 %v986, %v1205
  %v1212 = vsub.f32 %v988, %v1168
  %v1213 = vsub.f32 %v990, %v1205
  %v1214 = vsub.f32 %v994, %v1168
  %v1215 = vsub.f32 %v996, %v1205
  %v1216 = vsub.f32 %v998, %v1168
  %v1217 = vsub.f32 %v1000, %v1205
  %v1218 = vsub.f32 %v1004, %v1168
  %v1219 = vsub.f32 %v1006, %v1205
  %v1220 = vsub.f32 %v1008, %v1168
  %v1221 = vsub.f32 %v1010, %v1205
  %v1222 = vsub.f32 %v1014, %v1168
  %v1223 = vsub.f32 %v1016, %v1205
  %v1224 = vsub.f32 %v1018, %v1168
  %v1225 = vsub.f32 %v1020, %v1205
  %v1226 = vsub.f32 %v1024, %v1168
  %v1227 = vsub.f32 %v1026, %v1205
  %v1228 = vsub.f32 %v1028, %v1168
  %v1229 = vsub.f32 %v1030, %v1205
  %v1230 = vsub.f32 %v1034, %v1168
  %v1231 = vsub.f32 %v1036, %v1205
  %v1232 = vsub.f32 %v1038, %v1168
  %v1233 = vsub.f32 %v1040, %v1205
  %v1234 = vsub.f32 %v1044, %v1168
  %v1235 = vsub.f32 %v1046, %v1205
  %v1236 = vsub.f32 %v1048, %v1168
  %v1237 = vsub.f32 %v1050, %v1205
  %v1238 = vsub.f32 %v1054, %v1168
  %v1239 = vsub.f32 %v1056, %v1205
  %v1240 = vsub.f32 %v1058, %v1168
  %v1241 = vsub.f32 %v1060, %v1205
  %v1242 = vsub.f32 %v1064, %v1168
  %v1243 = vsub.f32 %v1066, %v1205
  %v1244 = vsub.f32 %v1068, %v1168
  %v1245 = vsub.f32 %v1070, %v1205
  %v1246 = vsub.f32 %v1074, %v1168
  %v1247 = vsub.f32 %v1076, %v1205
  %v1248 = vsub.f32 %v1078, %v1168
  %v1249 = vsub.f32 %v1080, %v1205
  %v1250 = vsub.f32 %v1084, %v1168
  %v1251 = vsub.f32 %v1086, %v1205
  %v1252 = vsub.f32 %v1088, %v1168
  %v1253 = vsub.f32 %v1090, %v1205
  %v1254 = vsub.f32 %v1094, %v1168
  %v1255 = vsub.f32 %v1096, %v1205
  %v1256 = vsub.f32 %v1098, %v1168
  %v1257 = vsub.f32 %v1100, %v1205
  %v1258 = vsub.f32 %v1104, %v1168
  %v1259 = vsub.f32 %v1106, %v1205
  %v1260 = vsub.f32 %v1108, %v1168
  %v1261 = vsub.f32 %v1110, %v1205
  %v1262 = vsub.f32 %v1114, %v1168
  %v1263 = vsub.f32 %v1116, %v1205
  %v1264 = vsub.f32 %v1118, %v1168
  %v1265 = vsub.f32 %v1120, %v1205
  %v1266 = vsub.f32 %v1124, %v1168
  %v1267 = vsub.f32 %v1126, %v1205
  %v1268 = vsub.f32 %v1128, %v1168
  %v1269 = vsub.f32 %v1130, %v1205
  %v1270 = vmul.f32 %v1206, 1.442695
  %v1271 = vpow.pop %v1270
  %v1272 = vmul.f32 %v1207, 1.442695
  %v1273 = vpow.pop %v1272
  %v1274 = vmul.f32 %v1208, 1.442695
  %v1275 = vpow.pop %v1274
  %v1276 = vmul.f32 %v1209, 1.442695
  %v1277 = vpow.pop %v1276
  %v1278 = vmul.f32 %v1210, 1.442695
  %v1279 = vpow.pop %v1278
  %v1280 = vmul.f32 %v1211, 1.442695
  %v1281 = vpow.pop %v1280
  %v1282 = vmul.f32 %v1212, 1.442695
  %v1283 = vpow.pop %v1282
  %v1284 = vmul.f32 %v1213, 1.442695
  %v1285 = vpow.pop %v1284
  %v1286 = vmul.f32 %v1214, 1.442695
  %v1287 = vpow.pop %v1286
  %v1288 = vmul.f32 %v1215, 1.442695
  %v1289 = vpow.pop %v1288
  %v1290 = vmul.f32 %v1216, 1.442695
  %v1291 = vpow.pop %v1290
  %v1292 = vmul.f32 %v1217, 1.442695
  %v1293 = vpow.pop %v1292
  %v1294 = vmul.f32 %v1218, 1.442695
  %v1295 = vpow.pop %v1294
  %v1296 = vmul.f32 %v1219, 1.442695
  %v1297 = vpow.pop %v1296
  %v1298 = vmul.f32 %v1220, 1.442695
  %v1299 = vpow.pop %v1298
  %v1300 = vmul.f32 %v1221, 1.442695
  %v1301 = vpow.pop %v1300
  %v1302 = vmul.f32 %v1222, 1.442695
  %v1303 = vpow.pop %v1302
  %v1304 = vmul.f32 %v1223, 1.442695
  %v1305 = vpow.pop %v1304
  %v1306 = vmul.f32 %v1224, 1.442695
  %v1307 = vpow.pop %v1306
  %v1308 = vmul.f32 %v1225, 1.442695
  %v1309 = vpow.pop %v1308
  %v1310 = vmul.f32 %v1226, 1.442695
  %v1311 = vpow.pop %v1310
  %v1312 = vmul.f32 %v1227, 1.442695
  %v1313 = vpow.pop %v1312
  %v1314 = vmul.f32 %v1228, 1.442695
  %v1315 = vpow.pop %v1314
  %v1316 = vmul.f32 %v1229, 1.442695
  %v1317 = vpow.pop %v1316
  %v1318 = vmul.f32 %v1230, 1.442695
  %v1319 = vpow.pop %v1318
  %v1320 = vmul.f32 %v1231, 1.442695
  %v1321 = vpow.pop %v1320
  %v1322 = vmul.f32 %v1232, 1.442695
  %v1323 = vpow.pop %v1322
  %v1324 = vmul.f32 %v1233, 1.442695
  %v1325 = vpow.pop %v1324
  %v1326 = vmul.f32 %v1234, 1.442695
  %v1327 = vpow.pop %v1326
  %v1328 = vmul.f32 %v1235, 1.442695
  %v1329 = vpow.pop %v1328
  %v1330 = vmul.f32 %v1236, 1.442695
  %v1331 = vpow.pop %v1330
  %v1332 = vmul.f32 %v1237, 1.442695
  %v1333 = vpow.pop %v1332
  %v1334 = vmul.f32 %v1238, 1.442695
  %v1335 = vpow.pop %v1334
  %v1336 = vmul.f32 %v1239, 1.442695
  %v1337 = vpow.pop %v1336
  %v1338 = vmul.f32 %v1240, 1.442695
  %v1339 = vpow.pop %v1338
  %v1340 = vmul.f32 %v1241, 1.442695
  %v1341 = vpow.pop %v1340
  %v1342 = vmul.f32 %v1242, 1.442695
  %v1343 = vpow.pop %v1342
  %v1344 = vmul.f32 %v1243, 1.442695
  %v1345 = vpow.pop %v1344
  %v1346 = vmul.f32 %v1244, 1.442695
  %v1347 = vpow.pop %v1346
  %v1348 = vmul.f32 %v1245, 1.442695
  %v1349 = vpow.pop %v1348
  %v1350 = vmul.f32 %v1246, 1.442695
  %v1351 = vpow.pop %v1350
  %v1352 = vmul.f32 %v1247, 1.442695
  %v1353 = vpow.pop %v1352
  %v1354 = vmul.f32 %v1248, 1.442695
  %v1355 = vpow.pop %v1354
  %v1356 = vmul.f32 %v1249, 1.442695
  %v1357 = vpow.pop %v1356
  %v1358 = vmul.f32 %v1250, 1.442695
  %v1359 = vpow.pop %v1358
  %v1360 = vmul.f32 %v1251, 1.442695
  %v1361 = vpow.pop %v1360
  %v1362 = vmul.f32 %v1252, 1.442695
  %v1363 = vpow.pop %v1362
  %v1364 = vmul.f32 %v1253, 1.442695
  %v1365 = vpow.pop %v1364
  %v1366 = vmul.f32 %v1254, 1.442695
  %v1367 = vpow.pop %v1366
  %v1368 = vmul.f32 %v1255, 1.442695
  %v1369 = vpow.pop %v1368
  %v1370 = vmul.f32 %v1256, 1.442695
  %v1371 = vpow.pop %v1370
  %v1372 = vmul.f32 %v1257, 1.442695
  %v1373 = vpow.pop %v1372
  %v1374 = vmul.f32 %v1258, 1.442695
  %v1375 = vpow.pop %v1374
  %v1376 = vmul.f32 %v1259, 1.442695
  %v1377 = vpow.pop %v1376
  %v1378 = vmul.f32 %v1260, 1.442695
  %v1379 = vpow.pop %v1378
  %v1380 = vmul.f32 %v1261, 1.442695
  %v1381 = vpow.pop %v1380
  %v1382 = vmul.f32 %v1262, 1.442695
  %v1383 = vpow.pop %v1382
  %v1384 = vmul.f32 %v1263, 1.442695
  %v1385 = vpow.pop %v1384
  %v1386 = vmul.f32 %v1264, 1.442695
  %v1387 = vpow.pop %v1386
  %v1388 = vmul.f32 %v1265, 1.442695
  %v1389 = vpow.pop %v1388
  %v1390 = vmul.f32 %v1266, 1.442695
  %v1391 = vpow.pop %v1390
  %v1392 = vmul.f32 %v1267, 1.442695
  %v1393 = vpow.pop %v1392
  %v1394 = vmul.f32 %v1268, 1.442695
  %v1395 = vpow.pop %v1394
  %v1396 = vmul.f32 %v1269, 1.442695
  %v1397 = vpow.pop %v1396
  %v1398 = vpack.c.bf16 %v1275, %v1271
  %v1399 = vpack.c.bf16 %v1277, %v1273
  %v1400 = vpack.c.bf16 %v1283, %v1279
  %v1401 = vpack.c.bf16 %v1285, %v1281
  %v1402 = vpack.c.bf16 %v1291, %v1287
  %v1403 = vpack.c.bf16 %v1293, %v1289
  %v1404 = vpack.c.bf16 %v1299, %v1295
  %v1405 = vpack.c.bf16 %v1301, %v1297
  %v1406 = vpack.c.bf16 %v1307, %v1303
  %v1407 = vpack.c.bf16 %v1309, %v1305
  %v1408 = vpack.c.bf16 %v1315, %v1311
  %v1409 = vpack.c.bf16 %v1317, %v1313
  %v1410 = vpack.c.bf16 %v1323, %v1319
  %v1411 = vpack.c.bf16 %v1325, %v1321
  %v1412 = vpack.c.bf16 %v1331, %v1327
  %v1413 = vpack.c.bf16 %v1333, %v1329
  %v1414 = vpack.c.bf16 %v1339, %v1335
  %v1415 = vpack.c.bf16 %v1341, %v1337
  %v1416 = vpack.c.bf16 %v1347, %v1343
  %v1417 = vpack.c.bf16 %v1349, %v1345
  %v1418 = vpack.c.bf16 %v1355, %v1351
  %v1419 = vpack.c.bf16 %v1357, %v1353
  %v1420 = vpack.c.bf16 %v1363, %v1359
  %v1421 = vpack.c.bf16 %v1365, %v1361
  %v1422 = vpack.c.bf16 %v1371, %v1367
  %v1423 = vpack.c.bf16 %v1373, %v1369
  %v1424 = vpack.c.bf16 %v1379, %v1375
  %v1425 = vpack.c.bf16 %v1381, %v1377
  %v1426 = vpack.c.bf16 %v1387, %v1383
  %v1427 = vpack.c.bf16 %v1389, %v1385
  %v1428 = vpack.c.bf16 %v1395, %v1391
  %v1429 = vpack.c.bf16 %v1397, %v1393
  %1430 = vmatprep.subr.bf16.mxu0 %v1413
  %1431 = vmatpush1.bf16.msra.mxu0 %v1412
  %1432 = vmatprep.subr.bf16.mxu0 %v1411
  %1433 = vmatpush1.bf16.msra.mxu0 %v1410
  %1434 = vmatprep.subr.bf16.mxu0 %v1409
  %1435 = vmatpush1.bf16.msra.mxu0 %v1408
  %1436 = vmatprep.subr.bf16.mxu0 %v1407
  %1437 = vmatpush1.bf16.msra.mxu0 %v1406
  %1438 = vmatprep.subr.bf16.mxu0 %v1405
  %1439 = vmatpush1.bf16.msra.mxu0 %v1404
  %1440 = vmatprep.subr.bf16.mxu0 %v1403
  %1441 = vmatpush1.bf16.msra.mxu0 %v1402
  %1442 = vmatprep.subr.bf16.mxu0 %v1401
  %1443 = vmatpush1.bf16.msra.mxu0 %v1400
  %1444 = vmatprep.subr.bf16.mxu0 %v1399
  %1445 = vmatpush1.bf16.msra.mxu0 %v1398
  %1446 = vmatprep.subr.bf16.mxu0 %v1429
  %1447 = vmatpush2.bf16.msra.mxu0 %v1428
  %1448 = vmatprep.subr.bf16.mxu0 %v1427
  %1449 = vmatpush2.bf16.msra.mxu0 %v1426
  %1450 = vmatprep.subr.bf16.mxu0 %v1425
  %1451 = vmatpush2.bf16.msra.mxu0 %v1424
  %1452 = vmatprep.subr.bf16.mxu0 %v1423
  %1453 = vmatpush2.bf16.msra.mxu0 %v1422
  %1454 = vmatprep.subr.bf16.mxu0 %v1421
  %1455 = vmatpush2.bf16.msra.mxu0 %v1420
  %1456 = vmatprep.subr.bf16.mxu0 %v1419
  %1457 = vmatpush2.bf16.msra.mxu0 %v1418
  %1458 = vmatprep.subr.bf16.mxu0 %v1417
  %1459 = vmatpush2.bf16.msra.mxu0 %v1416
  %1460 = vmatprep.subr.bf16.mxu0 %v1415
  %1461 = vmatpush2.bf16.msra.mxu0 %v1414
  %1462 = vmatprep.mubr.bf16.mxu0 %v852
  %1463 = vmatmul.mubr.bf16.gmra.mxu0 %v851
  %v1464 = vpop.f32.mrf.mxu0
  %v1465 = vadd.f32 0.0, %v1464
  %v1466 = vpop.f32.mrf.mxu0
  %v1467 = vadd.f32 0.0, %v1466
  %v1468 = vpop.f32.mrf.mxu0
  %v1469 = vpop.f32.mrf.mxu0
  %1470 = vdwg.mxu0
  %v1471 = vrcp.pop %v1465
  %v1472 = vrcp.pop %v1467
  %v1473 = vlaneseq
  %v1474 = vshrl.u32 %v1473, 7
  %v1475 = vsub.s32 4, %v1474
  %v1476 = vrot.slane %v1471, %v1475
  %v1477 = vlaneseq
  %v1478 = vshrl.u32 %v1477, 7
  %v1479 = vsub.s32 4, %v1478
  %v1480 = vrot.slane %v1472, %v1479
  %v1481 = vmul.f32 %v1465, %v1476
  %v1482 = vmul.f32 %v1467, %v1480
  %s1483 = scalar_lea.vmem %s1, 24
  %v1484 = vld [vmem:[%s1483] sm:$0xff]
  %v1485 = vld [vmem:[%s1483 + $0x8] sm:$0xff]
  %v1486 = vld [vmem:[%s1483 + $0x10] sm:$0xff]
  %v1488 = vsel %vm30, %v1484, 0
  %v1491 = vsel %vm30, %v1485, 0
  %v1494 = vsel %vm30, %v1486, 0
  %1496 = vmatprep.subr.mxu0 0.0
  %1497 = vmatpush1.msra.mxu0 0.0
  %1498 = vmatprep.subr.mxu0 0.0
  %1499 = vmatpush1.msra.mxu0 0.0
  %1500 = vmatprep.subr.mxu0 0.0
  %1501 = vmatpush1.msra.mxu0 0.0
  %1502 = vmatprep.subr.mxu0 0.0
  %1503 = vmatpush1.msra.mxu0 0.0
  %1504 = vmatprep.subr.mxu0 0.0
  %1505 = vmatpush1.msra.mxu0 0.0
  %1506 = vmatprep.subr.mxu0 0.0
  %1507 = vmatpush1.msra.mxu0 0.0
  %1508 = vmatprep.subr.mxu0 0.0
  %1509 = vmatpush1.msra.mxu0 0.0
  %1510 = vmatprep.subr.mxu0 0.0
  %1511 = vmatpush1.msra.mxu0 0.0
  %1512 = vmatprep.subr.mxu0 0.0
  %1513 = vmatpush1.msra.mxu0 0.0
  %1514 = vmatprep.subr.mxu0 0.0
  %1515 = vmatpush1.msra.mxu0 0.0
  %1516 = vmatprep.subr.mxu0 0.0
  %1517 = vmatpush1.msra.mxu0 0.0
  %1518 = vmatprep.subr.mxu0 0.0
  %1519 = vmatpush1.msra.mxu0 0.0
  %1520 = vmatprep.subr.mxu0 0.0
  %1521 = vmatpush1.msra.mxu0 0.0
  %1522 = vmatprep.subr.mxu0 0.0
  %1523 = vmatpush1.msra.mxu0 0.0
  %1524 = vmatprep.subr.mxu0 0.0
  %1525 = vmatpush1.msra.mxu0 0.0
  %1526 = vmatprep.subr.mxu0 %v844
  %1527 = vmatpush1.msra.mxu0 %v843
  %1528 = vmatprep.subr.mxu0 0.0
  %1529 = vmatpush2.msra.mxu0 0.0
  %1530 = vmatprep.subr.mxu0 0.0
  %1531 = vmatpush2.msra.mxu0 0.0
  %1532 = vmatprep.subr.mxu0 0.0
  %1533 = vmatpush2.msra.mxu0 0.0
  %1534 = vmatprep.subr.mxu0 0.0
  %1535 = vmatpush2.msra.mxu0 0.0
  %1536 = vmatprep.subr.mxu0 0.0
  %1537 = vmatpush2.msra.mxu0 0.0
  %1538 = vmatprep.subr.mxu0 0.0
  %1539 = vmatpush2.msra.mxu0 0.0
  %1540 = vmatprep.subr.mxu0 0.0
  %1541 = vmatpush2.msra.mxu0 0.0
  %1542 = vmatprep.subr.mxu0 0.0
  %1543 = vmatpush2.msra.mxu0 0.0
  %1544 = vmatprep.subr.mxu0 0.0
  %1545 = vmatpush2.msra.mxu0 0.0
  %1546 = vmatprep.subr.mxu0 0.0
  %1547 = vmatpush2.msra.mxu0 0.0
  %1548 = vmatprep.subr.mxu0 0.0
  %1549 = vmatpush2.msra.mxu0 0.0
  %1550 = vmatprep.subr.mxu0 0.0
  %1551 = vmatpush2.msra.mxu0 0.0
  %1552 = vmatprep.subr.mxu0 0.0
  %1553 = vmatpush2.msra.mxu0 0.0
  %1554 = vmatprep.subr.mxu0 0.0
  %1555 = vmatpush2.msra.mxu0 0.0
  %1556 = vmatprep.subr.mxu0 0.0
  %1557 = vmatpush2.msra.mxu0 0.0
  %1558 = vmatprep.subr.mxu0 0.0
  %1559 = vmatpush2.msra.mxu0 0.0
  %1560 = vmatprep.mubr.f32.mxu0 0.0
  %1561 = vmatmul.mubr.f32.gmra.mxu0 %v1488
  %v1562 = vpop.f32.mrf.mxu0
  %v1563 = vadd.f32 0.0, %v1562
  %v1564 = vpop.f32.mrf.mxu0
  %v1565 = vadd.f32 0.0, %v1564
  %1566 = vmatprep.mubr.f32.mxu0 0.0
  %1567 = vmatmul.mubr.f32.gmra.mxu0 %v1491
  %v1568 = vpop.f32.mrf.mxu0
  %v1569 = vadd.f32 0.0, %v1568
  %v1570 = vpop.f32.mrf.mxu0
  %v1571 = vadd.f32 0.0, %v1570
  %1572 = vmatprep.mubr.f32.mxu0 0.0
  %1573 = vmatmul.mubr.f32.gmra.mxu0 %v1494
  %v1574 = vpop.f32.mrf.mxu0
  %v1575 = vadd.f32 0.0, %v1574
  %v1576 = vpop.f32.mrf.mxu0
  %v1577 = vadd.f32 0.0, %v1576
  %1578 = vdwg.mxu0
  %1579 = vmatprep.subr.mxu0 0.0
  %1580 = vmatpush1.msra.mxu0 0.0
  %1581 = vmatprep.subr.mxu0 0.0
  %1582 = vmatpush1.msra.mxu0 0.0
  %1583 = vmatprep.subr.mxu0 0.0
  %1584 = vmatpush1.msra.mxu0 0.0
  %1585 = vmatprep.subr.mxu0 0.0
  %1586 = vmatpush1.msra.mxu0 0.0
  %1587 = vmatprep.subr.mxu0 0.0
  %1588 = vmatpush1.msra.mxu0 0.0
  %1589 = vmatprep.subr.mxu0 0.0
  %1590 = vmatpush1.msra.mxu0 0.0
  %1591 = vmatprep.subr.mxu0 0.0
  %1592 = vmatpush1.msra.mxu0 0.0
  %1593 = vmatprep.subr.mxu0 0.0
  %1594 = vmatpush1.msra.mxu0 0.0
  %1595 = vmatprep.subr.mxu0 0.0
  %1596 = vmatpush1.msra.mxu0 0.0
  %1597 = vmatprep.subr.mxu0 0.0
  %1598 = vmatpush1.msra.mxu0 0.0
  %1599 = vmatprep.subr.mxu0 0.0
  %1600 = vmatpush1.msra.mxu0 0.0
  %1601 = vmatprep.subr.mxu0 0.0
  %1602 = vmatpush1.msra.mxu0 0.0
  %1603 = vmatprep.subr.mxu0 0.0
  %1604 = vmatpush1.msra.mxu0 0.0
  %1605 = vmatprep.subr.mxu0 0.0
  %1606 = vmatpush1.msra.mxu0 0.0
  %1607 = vmatprep.subr.mxu0 0.0
  %1608 = vmatpush1.msra.mxu0 0.0
  %1609 = vmatprep.subr.mxu0 %v1482
  %1610 = vmatpush1.msra.mxu0 %v1481
  %1611 = vmatprep.subr.mxu0 0.0
  %1612 = vmatpush2.msra.mxu0 0.0
  %1613 = vmatprep.subr.mxu0 0.0
  %1614 = vmatpush2.msra.mxu0 0.0
  %1615 = vmatprep.subr.mxu0 0.0
  %1616 = vmatpush2.msra.mxu0 0.0
  %1617 = vmatprep.subr.mxu0 0.0
  %1618 = vmatpush2.msra.mxu0 0.0
  %1619 = vmatprep.subr.mxu0 0.0
  %1620 = vmatpush2.msra.mxu0 0.0
  %1621 = vmatprep.subr.mxu0 0.0
  %1622 = vmatpush2.msra.mxu0 0.0
  %1623 = vmatprep.subr.mxu0 0.0
  %1624 = vmatpush2.msra.mxu0 0.0
  %1625 = vmatprep.subr.mxu0 0.0
  %1626 = vmatpush2.msra.mxu0 0.0
  %1627 = vmatprep.subr.mxu0 0.0
  %1628 = vmatpush2.msra.mxu0 0.0
  %1629 = vmatprep.subr.mxu0 0.0
  %1630 = vmatpush2.msra.mxu0 0.0
  %1631 = vmatprep.subr.mxu0 0.0
  %1632 = vmatpush2.msra.mxu0 0.0
  %1633 = vmatprep.subr.mxu0 0.0
  %1634 = vmatpush2.msra.mxu0 0.0
  %1635 = vmatprep.subr.mxu0 0.0
  %1636 = vmatpush2.msra.mxu0 0.0
  %1637 = vmatprep.subr.mxu0 0.0
  %1638 = vmatpush2.msra.mxu0 0.0
  %1639 = vmatprep.subr.mxu0 0.0
  %1640 = vmatpush2.msra.mxu0 0.0
  %1641 = vmatprep.subr.mxu0 0.0
  %1642 = vmatpush2.msra.mxu0 0.0
  %1643 = vmatprep.mubr.f32.mxu0 0.0
  %1644 = vmatmul.mubr.f32.gmra.mxu0 %v1488
  %v1645 = vpop.f32.mrf.mxu0
  %v1646 = vadd.f32 0.0, %v1645
  %v1647 = vpop.f32.mrf.mxu0
  %v1648 = vadd.f32 0.0, %v1647
  %1649 = vmatprep.mubr.f32.mxu0 0.0
  %1650 = vmatmul.mubr.f32.gmra.mxu0 %v1491
  %v1651 = vpop.f32.mrf.mxu0
  %v1652 = vadd.f32 0.0, %v1651
  %v1653 = vpop.f32.mrf.mxu0
  %v1654 = vadd.f32 0.0, %v1653
  %1655 = vmatprep.mubr.f32.mxu0 0.0
  %1656 = vmatmul.mubr.f32.gmra.mxu0 %v1494
  %v1657 = vpop.f32.mrf.mxu0
  %v1658 = vadd.f32 0.0, %v1657
  %v1659 = vpop.f32.mrf.mxu0
  %v1660 = vadd.f32 0.0, %v1659
  %1661 = vdwg.mxu0
  %v1662 = vpack.c.bf16 %v1563, %v1563
  %v1663 = vpack.c.bf16 %v1565, %v1565
  %v1664 = vpack.c.bf16 %v1569, %v1569
  %v1665 = vpack.c.bf16 %v1571, %v1571
  %v1666 = vsel %vm22, 1.0, %v1575
  %v1667 = vsel %vm22, 1.0, %v1577
  %v1668 = vpack.c.bf16 %v1666, %v1666
  %v1669 = vpack.c.bf16 %v1667, %v1667
  %1670 = vxpose.xlu0.c.b16.start [1/8] %v1664, 128
  %1671 = vxpose.xlu0.c.b16.cont [2/8] 0, 128
  %1672 = vxpose.xlu0.c.b16.cont [3/8] 0, 128
  %1673 = vxpose.xlu0.c.b16.cont [4/8] 0, 128
  %1674 = vxpose.xlu0.c.b16.cont [5/8] 0, 128
  %1675 = vxpose.xlu0.c.b16.cont [6/8] 0, 128
  %1676 = vxpose.xlu0.c.b16.cont [7/8] 0, 128
  %1677 = vxpose.xlu0.c.b16.end [8/8] 0, 128
  %v1678 = vpop.trf.xlu0
  %v1679 = vpop.trf.xlu0
  %v1680 = vpop.trf.xlu0
  %v1681 = vpop.trf.xlu0
  %v1682 = vpop.trf.xlu0
  %v1683 = vpop.trf.xlu0
  %v1684 = vpop.trf.xlu0
  %v1685 = vpop.trf.xlu0
  %1686 = vxpose.xlu0.c.b16.start [1/8] %v1665, 128
  %1687 = vxpose.xlu0.c.b16.cont [2/8] 0, 128
  %1688 = vxpose.xlu0.c.b16.cont [3/8] 0, 128
  %1689 = vxpose.xlu0.c.b16.cont [4/8] 0, 128
  %1690 = vxpose.xlu0.c.b16.cont [5/8] 0, 128
  %1691 = vxpose.xlu0.c.b16.cont [6/8] 0, 128
  %1692 = vxpose.xlu0.c.b16.cont [7/8] 0, 128
  %1693 = vxpose.xlu0.c.b16.end [8/8] 0, 128
  %v1694 = vpop.trf.xlu0
  %v1695 = vpop.trf.xlu0
  %v1696 = vpop.trf.xlu0
  %v1697 = vpop.trf.xlu0
  %v1698 = vpop.trf.xlu0
  %v1699 = vpop.trf.xlu0
  %v1700 = vpop.trf.xlu0
  %v1701 = vpop.trf.xlu0
  %v1703 = vsel %vm30, %v1678, 0
  %v1706 = vsel %vm30, %v1679, 0
  %v1709 = vsel %vm30, %v1680, 0
  %v1712 = vsel %vm30, %v1681, 0
  %v1715 = vsel %vm30, %v1682, 0
  %v1718 = vsel %vm30, %v1683, 0
  %v1721 = vsel %vm30, %v1684, 0
  %v1724 = vsel %vm30, %v1685, 0
  %v1727 = vsel %vm30, %v1694, 0
  %v1730 = vsel %vm30, %v1695, 0
  %v1733 = vsel %vm30, %v1696, 0
  %v1736 = vsel %vm30, %v1697, 0
  %v1739 = vsel %vm30, %v1698, 0
  %v1742 = vsel %vm30, %v1699, 0
  %v1745 = vsel %vm30, %v1700, 0
  %v1748 = vsel %vm30, %v1701, 0
  %v1751 = vsel %vm294, %v1662, 0
  %v1754 = vsel %vm294, %v1663, 0
  %1756 = vmatprep.subr.bf16.mxu0 0
  %1757 = vmatpush1.bf16.msra.mxu0 0
  %1758 = vmatprep.subr.bf16.mxu0 0
  %1759 = vmatpush1.bf16.msra.mxu0 0
  %1760 = vmatprep.subr.bf16.mxu0 0
  %1761 = vmatpush1.bf16.msra.mxu0 0
  %1762 = vmatprep.subr.bf16.mxu0 0
  %1763 = vmatpush1.bf16.msra.mxu0 0
  %1764 = vmatprep.subr.bf16.mxu0 0
  %1765 = vmatpush1.bf16.msra.mxu0 0
  %1766 = vmatprep.subr.bf16.mxu0 0
  %1767 = vmatpush1.bf16.msra.mxu0 0
  %1768 = vmatprep.subr.bf16.mxu0 0
  %1769 = vmatpush1.bf16.msra.mxu0 0
  %1770 = vmatprep.subr.bf16.mxu0 %v1754
  %1771 = vmatpush1.bf16.msra.mxu0 %v1751
  %1772 = vmatprep.subr.bf16.mxu0 0
  %1773 = vmatpush2.bf16.msra.mxu0 0
  %1774 = vmatprep.subr.bf16.mxu0 0
  %1775 = vmatpush2.bf16.msra.mxu0 0
  %1776 = vmatprep.subr.bf16.mxu0 0
  %1777 = vmatpush2.bf16.msra.mxu0 0
  %1778 = vmatprep.subr.bf16.mxu0 0
  %1779 = vmatpush2.bf16.msra.mxu0 0
  %1780 = vmatprep.subr.bf16.mxu0 0
  %1781 = vmatpush2.bf16.msra.mxu0 0
  %1782 = vmatprep.subr.bf16.mxu0 0
  %1783 = vmatpush2.bf16.msra.mxu0 0
  %1784 = vmatprep.subr.bf16.mxu0 0
  %1785 = vmatpush2.bf16.msra.mxu0 0
  %1786 = vmatprep.subr.bf16.mxu0 0
  %1787 = vmatpush2.bf16.msra.mxu0 0
  %1788 = vmatprep.mubr.bf16.mxu0 0
  %1789 = vmatmul.mubr.bf16.gmra.mxu0 %v1703
  %v1790 = vpop.f32.mrf.mxu0
  %v1791 = vadd.f32 0.0, %v1790
  %v1792 = vpop.f32.mrf.mxu0
  %v1793 = vadd.f32 0.0, %v1792
  %v1794 = vpop.f32.mrf.mxu0
  %v1795 = vadd.f32 0.0, %v1794
  %v1796 = vpop.f32.mrf.mxu0
  %v1797 = vadd.f32 0.0, %v1796
  %1798 = vmatprep.mubr.bf16.mxu0 0
  %1799 = vmatmul.mubr.bf16.gmra.mxu0 %v1706
  %v1800 = vpop.f32.mrf.mxu0
  %v1801 = vadd.f32 0.0, %v1800
  %v1802 = vpop.f32.mrf.mxu0
  %v1803 = vadd.f32 0.0, %v1802
  %v1804 = vpop.f32.mrf.mxu0
  %v1805 = vadd.f32 0.0, %v1804
  %v1806 = vpop.f32.mrf.mxu0
  %v1807 = vadd.f32 0.0, %v1806
  %1808 = vmatprep.mubr.bf16.mxu0 0
  %1809 = vmatmul.mubr.bf16.gmra.mxu0 %v1709
  %v1810 = vpop.f32.mrf.mxu0
  %v1811 = vadd.f32 0.0, %v1810
  %v1812 = vpop.f32.mrf.mxu0
  %v1813 = vadd.f32 0.0, %v1812
  %v1814 = vpop.f32.mrf.mxu0
  %v1815 = vadd.f32 0.0, %v1814
  %v1816 = vpop.f32.mrf.mxu0
  %v1817 = vadd.f32 0.0, %v1816
  %1818 = vmatprep.mubr.bf16.mxu0 0
  %1819 = vmatmul.mubr.bf16.gmra.mxu0 %v1712
  %v1820 = vpop.f32.mrf.mxu0
  %v1821 = vadd.f32 0.0, %v1820
  %v1822 = vpop.f32.mrf.mxu0
  %v1823 = vadd.f32 0.0, %v1822
  %v1824 = vpop.f32.mrf.mxu0
  %v1825 = vadd.f32 0.0, %v1824
  %v1826 = vpop.f32.mrf.mxu0
  %v1827 = vadd.f32 0.0, %v1826
  %1828 = vmatprep.mubr.bf16.mxu0 0
  %1829 = vmatmul.mubr.bf16.gmra.mxu0 %v1715
  %v1830 = vpop.f32.mrf.mxu0
  %v1831 = vadd.f32 0.0, %v1830
  %v1832 = vpop.f32.mrf.mxu0
  %v1833 = vadd.f32 0.0, %v1832
  %v1834 = vpop.f32.mrf.mxu0
  %v1835 = vadd.f32 0.0, %v1834
  %v1836 = vpop.f32.mrf.mxu0
  %v1837 = vadd.f32 0.0, %v1836
  %1838 = vmatprep.mubr.bf16.mxu0 0
  %1839 = vmatmul.mubr.bf16.gmra.mxu0 %v1718
  %v1840 = vpop.f32.mrf.mxu0
  %v1841 = vadd.f32 0.0, %v1840
  %v1842 = vpop.f32.mrf.mxu0
  %v1843 = vadd.f32 0.0, %v1842
  %v1844 = vpop.f32.mrf.mxu0
  %v1845 = vadd.f32 0.0, %v1844
  %v1846 = vpop.f32.mrf.mxu0
  %v1847 = vadd.f32 0.0, %v1846
  %1848 = vmatprep.mubr.bf16.mxu0 0
  %1849 = vmatmul.mubr.bf16.gmra.mxu0 %v1721
  %v1850 = vpop.f32.mrf.mxu0
  %v1851 = vadd.f32 0.0, %v1850
  %v1852 = vpop.f32.mrf.mxu0
  %v1853 = vadd.f32 0.0, %v1852
  %v1854 = vpop.f32.mrf.mxu0
  %v1855 = vadd.f32 0.0, %v1854
  %v1856 = vpop.f32.mrf.mxu0
  %v1857 = vadd.f32 0.0, %v1856
  %1858 = vmatprep.mubr.bf16.mxu0 0
  %1859 = vmatmul.mubr.bf16.gmra.mxu0 %v1724
  %v1860 = vpop.f32.mrf.mxu0
  %v1861 = vadd.f32 0.0, %v1860
  %v1862 = vpop.f32.mrf.mxu0
  %v1863 = vadd.f32 0.0, %v1862
  %v1864 = vpop.f32.mrf.mxu0
  %v1865 = vadd.f32 0.0, %v1864
  %v1866 = vpop.f32.mrf.mxu0
  %v1867 = vadd.f32 0.0, %v1866
  %1868 = vmatprep.mubr.bf16.mxu0 0
  %1869 = vmatmul.mubr.bf16.gmra.mxu0 %v1727
  %v1870 = vpop.f32.mrf.mxu0
  %v1871 = vadd.f32 0.0, %v1870
  %v1872 = vpop.f32.mrf.mxu0
  %v1873 = vadd.f32 0.0, %v1872
  %v1874 = vpop.f32.mrf.mxu0
  %v1875 = vadd.f32 0.0, %v1874
  %v1876 = vpop.f32.mrf.mxu0
  %v1877 = vadd.f32 0.0, %v1876
  %1878 = vmatprep.mubr.bf16.mxu0 0
  %1879 = vmatmul.mubr.bf16.gmra.mxu0 %v1730
  %v1880 = vpop.f32.mrf.mxu0
  %v1881 = vadd.f32 0.0, %v1880
  %v1882 = vpop.f32.mrf.mxu0
  %v1883 = vadd.f32 0.0, %v1882
  %v1884 = vpop.f32.mrf.mxu0
  %v1885 = vadd.f32 0.0, %v1884
  %v1886 = vpop.f32.mrf.mxu0
  %v1887 = vadd.f32 0.0, %v1886
  %1888 = vmatprep.mubr.bf16.mxu0 0
  %1889 = vmatmul.mubr.bf16.gmra.mxu0 %v1733
  %v1890 = vpop.f32.mrf.mxu0
  %v1891 = vadd.f32 0.0, %v1890
  %v1892 = vpop.f32.mrf.mxu0
  %v1893 = vadd.f32 0.0, %v1892
  %v1894 = vpop.f32.mrf.mxu0
  %v1895 = vadd.f32 0.0, %v1894
  %v1896 = vpop.f32.mrf.mxu0
  %v1897 = vadd.f32 0.0, %v1896
  %1898 = vmatprep.mubr.bf16.mxu0 0
  %1899 = vmatmul.mubr.bf16.gmra.mxu0 %v1736
  %v1900 = vpop.f32.mrf.mxu0
  %v1901 = vadd.f32 0.0, %v1900
  %v1902 = vpop.f32.mrf.mxu0
  %v1903 = vadd.f32 0.0, %v1902
  %v1904 = vpop.f32.mrf.mxu0
  %v1905 = vadd.f32 0.0, %v1904
  %v1906 = vpop.f32.mrf.mxu0
  %v1907 = vadd.f32 0.0, %v1906
  %1908 = vmatprep.mubr.bf16.mxu0 0
  %1909 = vmatmul.mubr.bf16.gmra.mxu0 %v1739
  %v1910 = vpop.f32.mrf.mxu0
  %v1911 = vadd.f32 0.0, %v1910
  %v1912 = vpop.f32.mrf.mxu0
  %v1913 = vadd.f32 0.0, %v1912
  %v1914 = vpop.f32.mrf.mxu0
  %v1915 = vadd.f32 0.0, %v1914
  %v1916 = vpop.f32.mrf.mxu0
  %v1917 = vadd.f32 0.0, %v1916
  %1918 = vmatprep.mubr.bf16.mxu0 0
  %1919 = vmatmul.mubr.bf16.gmra.mxu0 %v1742
  %v1920 = vpop.f32.mrf.mxu0
  %v1921 = vadd.f32 0.0, %v1920
  %v1922 = vpop.f32.mrf.mxu0
  %v1923 = vadd.f32 0.0, %v1922
  %v1924 = vpop.f32.mrf.mxu0
  %v1925 = vadd.f32 0.0, %v1924
  %v1926 = vpop.f32.mrf.mxu0
  %v1927 = vadd.f32 0.0, %v1926
  %1928 = vmatprep.mubr.bf16.mxu0 0
  %1929 = vmatmul.mubr.bf16.gmra.mxu0 %v1745
  %v1930 = vpop.f32.mrf.mxu0
  %v1931 = vadd.f32 0.0, %v1930
  %v1932 = vpop.f32.mrf.mxu0
  %v1933 = vadd.f32 0.0, %v1932
  %v1934 = vpop.f32.mrf.mxu0
  %v1935 = vadd.f32 0.0, %v1934
  %v1936 = vpop.f32.mrf.mxu0
  %v1937 = vadd.f32 0.0, %v1936
  %1938 = vmatprep.mubr.bf16.mxu0 0
  %1939 = vmatmul.mubr.bf16.gmra.mxu0 %v1748
  %v1940 = vpop.f32.mrf.mxu0
  %v1941 = vadd.f32 0.0, %v1940
  %v1942 = vpop.f32.mrf.mxu0
  %v1943 = vadd.f32 0.0, %v1942
  %v1944 = vpop.f32.mrf.mxu0
  %v1945 = vadd.f32 0.0, %v1944
  %v1946 = vpop.f32.mrf.mxu0
  %v1947 = vadd.f32 0.0, %v1946
  %1948 = vdwg.mxu0
  %v1949 = vmax.f32 %v1791, %v1801
  %v1950 = vmax.f32 %v1795, %v1805
  %v1951 = vmax.f32 %v1949, %v1811
  %v1952 = vmax.f32 %v1950, %v1815
  %v1953 = vmax.f32 %v1951, %v1821
  %v1954 = vmax.f32 %v1952, %v1825
  %v1955 = vmax.f32 %v1953, %v1831
  %v1956 = vmax.f32 %v1954, %v1835
  %v1957 = vmax.f32 %v1955, %v1841
  %v1958 = vmax.f32 %v1956, %v1845
  %v1959 = vmax.f32 %v1957, %v1851
  %v1960 = vmax.f32 %v1958, %v1855
  %v1961 = vmax.f32 %v1959, %v1861
  %v1962 = vmax.f32 %v1960, %v1865
  %v1963 = vmax.f32 %v1961, %v1871
  %v1964 = vmax.f32 %v1962, %v1875
  %v1965 = vmax.f32 %v1963, %v1881
  %v1966 = vmax.f32 %v1964, %v1885
  %v1967 = vmax.f32 %v1965, %v1891
  %v1968 = vmax.f32 %v1966, %v1895
  %v1969 = vmax.f32 %v1967, %v1901
  %v1970 = vmax.f32 %v1968, %v1905
  %v1971 = vmax.f32 %v1969, %v1911
  %v1972 = vmax.f32 %v1970, %v1915
  %v1973 = vmax.f32 %v1971, %v1921
  %v1974 = vmax.f32 %v1972, %v1925
  %v1975 = vmax.f32 %v1973, %v1931
  %v1976 = vmax.f32 %v1974, %v1935
  %v1977 = vmax.f32 %v1975, %v1941
  %v1978 = vmax.f32 %v1976, %v1945
  %v1979 = vmax.f32 %v1977, %v1978
  %v1980 = vrot.slane %v1979, 4
  %v1981 = vmax.f32 %v1979, %v1980
  %v1982 = vrot.slane %v1981, 2
  %v1983 = vmax.f32 %v1981, %v1982
  %v1984 = vrot.slane %v1983, 1
  %v1985 = vmax.f32 %v1983, %v1984
  %v1986 = vmax.f32 %v1793, %v1803
  %v1987 = vmax.f32 %v1797, %v1807
  %v1988 = vmax.f32 %v1986, %v1813
  %v1989 = vmax.f32 %v1987, %v1817
  %v1990 = vmax.f32 %v1988, %v1823
  %v1991 = vmax.f32 %v1989, %v1827
  %v1992 = vmax.f32 %v1990, %v1833
  %v1993 = vmax.f32 %v1991, %v1837
  %v1994 = vmax.f32 %v1992, %v1843
  %v1995 = vmax.f32 %v1993, %v1847
  %v1996 = vmax.f32 %v1994, %v1853
  %v1997 = vmax.f32 %v1995, %v1857
  %v1998 = vmax.f32 %v1996, %v1863
  %v1999 = vmax.f32 %v1997, %v1867
  %v2000 = vmax.f32 %v1998, %v1873
  %v2001 = vmax.f32 %v1999, %v1877
  %v2002 = vmax.f32 %v2000, %v1883
  %v2003 = vmax.f32 %v2001, %v1887
  %v2004 = vmax.f32 %v2002, %v1893
  %v2005 = vmax.f32 %v2003, %v1897
  %v2006 = vmax.f32 %v2004, %v1903
  %v2007 = vmax.f32 %v2005, %v1907
  %v2008 = vmax.f32 %v2006, %v1913
  %v2009 = vmax.f32 %v2007, %v1917
  %v2010 = vmax.f32 %v2008, %v1923
  %v2011 = vmax.f32 %v2009, %v1927
  %v2012 = vmax.f32 %v2010, %v1933
  %v2013 = vmax.f32 %v2011, %v1937
  %v2014 = vmax.f32 %v2012, %v1943
  %v2015 = vmax.f32 %v2013, %v1947
  %v2016 = vmax.f32 %v2014, %v2015
  %v2017 = vrot.slane %v2016, 4
  %v2018 = vmax.f32 %v2016, %v2017
  %v2019 = vrot.slane %v2018, 2
  %v2020 = vmax.f32 %v2018, %v2019
  %v2021 = vrot.slane %v2020, 1
  %v2022 = vmax.f32 %v2020, %v2021
  %v2023 = vsub.f32 %v1791, %v1985
  %v2024 = vsub.f32 %v1793, %v2022
  %v2025 = vsub.f32 %v1795, %v1985
  %v2026 = vsub.f32 %v1797, %v2022
  %v2027 = vsub.f32 %v1801, %v1985
  %v2028 = vsub.f32 %v1803, %v2022
  %v2029 = vsub.f32 %v1805, %v1985
  %v2030 = vsub.f32 %v1807, %v2022
  %v2031 = vsub.f32 %v1811, %v1985
  %v2032 = vsub.f32 %v1813, %v2022
  %v2033 = vsub.f32 %v1815, %v1985
  %v2034 = vsub.f32 %v1817, %v2022
  %v2035 = vsub.f32 %v1821, %v1985
  %v2036 = vsub.f32 %v1823, %v2022
  %v2037 = vsub.f32 %v1825, %v1985
  %v2038 = vsub.f32 %v1827, %v2022
  %v2039 = vsub.f32 %v1831, %v1985
  %v2040 = vsub.f32 %v1833, %v2022
  %v2041 = vsub.f32 %v1835, %v1985
  %v2042 = vsub.f32 %v1837, %v2022
  %v2043 = vsub.f32 %v1841, %v1985
  %v2044 = vsub.f32 %v1843, %v2022
  %v2045 = vsub.f32 %v1845, %v1985
  %v2046 = vsub.f32 %v1847, %v2022
  %v2047 = vsub.f32 %v1851, %v1985
  %v2048 = vsub.f32 %v1853, %v2022
  %v2049 = vsub.f32 %v1855, %v1985
  %v2050 = vsub.f32 %v1857, %v2022
  %v2051 = vsub.f32 %v1861, %v1985
  %v2052 = vsub.f32 %v1863, %v2022
  %v2053 = vsub.f32 %v1865, %v1985
  %v2054 = vsub.f32 %v1867, %v2022
  %v2055 = vsub.f32 %v1871, %v1985
  %v2056 = vsub.f32 %v1873, %v2022
  %v2057 = vsub.f32 %v1875, %v1985
  %v2058 = vsub.f32 %v1877, %v2022
  %v2059 = vsub.f32 %v1881, %v1985
  %v2060 = vsub.f32 %v1883, %v2022
  %v2061 = vsub.f32 %v1885, %v1985
  %v2062 = vsub.f32 %v1887, %v2022
  %v2063 = vsub.f32 %v1891, %v1985
  %v2064 = vsub.f32 %v1893, %v2022
  %v2065 = vsub.f32 %v1895, %v1985
  %v2066 = vsub.f32 %v1897, %v2022
  %v2067 = vsub.f32 %v1901, %v1985
  %v2068 = vsub.f32 %v1903, %v2022
  %v2069 = vsub.f32 %v1905, %v1985
  %v2070 = vsub.f32 %v1907, %v2022
  %v2071 = vsub.f32 %v1911, %v1985
  %v2072 = vsub.f32 %v1913, %v2022
  %v2073 = vsub.f32 %v1915, %v1985
  %v2074 = vsub.f32 %v1917, %v2022
  %v2075 = vsub.f32 %v1921, %v1985
  %v2076 = vsub.f32 %v1923, %v2022
  %v2077 = vsub.f32 %v1925, %v1985
  %v2078 = vsub.f32 %v1927, %v2022
  %v2079 = vsub.f32 %v1931, %v1985
  %v2080 = vsub.f32 %v1933, %v2022
  %v2081 = vsub.f32 %v1935, %v1985
  %v2082 = vsub.f32 %v1937, %v2022
  %v2083 = vsub.f32 %v1941, %v1985
  %v2084 = vsub.f32 %v1943, %v2022
  %v2085 = vsub.f32 %v1945, %v1985
  %v2086 = vsub.f32 %v1947, %v2022
  %v2087 = vmul.f32 %v2023, 1.442695
  %v2088 = vpow.pop %v2087
  %v2089 = vmul.f32 %v2024, 1.442695
  %v2090 = vpow.pop %v2089
  %v2091 = vmul.f32 %v2025, 1.442695
  %v2092 = vpow.pop %v2091
  %v2093 = vmul.f32 %v2026, 1.442695
  %v2094 = vpow.pop %v2093
  %v2095 = vmul.f32 %v2027, 1.442695
  %v2096 = vpow.pop %v2095
  %v2097 = vmul.f32 %v2028, 1.442695
  %v2098 = vpow.pop %v2097
  %v2099 = vmul.f32 %v2029, 1.442695
  %v2100 = vpow.pop %v2099
  %v2101 = vmul.f32 %v2030, 1.442695
  %v2102 = vpow.pop %v2101
  %v2103 = vmul.f32 %v2031, 1.442695
  %v2104 = vpow.pop %v2103
  %v2105 = vmul.f32 %v2032, 1.442695
  %v2106 = vpow.pop %v2105
  %v2107 = vmul.f32 %v2033, 1.442695
  %v2108 = vpow.pop %v2107
  %v2109 = vmul.f32 %v2034, 1.442695
  %v2110 = vpow.pop %v2109
  %v2111 = vmul.f32 %v2035, 1.442695
  %v2112 = vpow.pop %v2111
  %v2113 = vmul.f32 %v2036, 1.442695
  %v2114 = vpow.pop %v2113
  %v2115 = vmul.f32 %v2037, 1.442695
  %v2116 = vpow.pop %v2115
  %v2117 = vmul.f32 %v2038, 1.442695
  %v2118 = vpow.pop %v2117
  %v2119 = vmul.f32 %v2039, 1.442695
  %v2120 = vpow.pop %v2119
  %v2121 = vmul.f32 %v2040, 1.442695
  %v2122 = vpow.pop %v2121
  %v2123 = vmul.f32 %v2041, 1.442695
  %v2124 = vpow.pop %v2123
  %v2125 = vmul.f32 %v2042, 1.442695
  %v2126 = vpow.pop %v2125
  %v2127 = vmul.f32 %v2043, 1.442695
  %v2128 = vpow.pop %v2127
  %v2129 = vmul.f32 %v2044, 1.442695
  %v2130 = vpow.pop %v2129
  %v2131 = vmul.f32 %v2045, 1.442695
  %v2132 = vpow.pop %v2131
  %v2133 = vmul.f32 %v2046, 1.442695
  %v2134 = vpow.pop %v2133
  %v2135 = vmul.f32 %v2047, 1.442695
  %v2136 = vpow.pop %v2135
  %v2137 = vmul.f32 %v2048, 1.442695
  %v2138 = vpow.pop %v2137
  %v2139 = vmul.f32 %v2049, 1.442695
  %v2140 = vpow.pop %v2139
  %v2141 = vmul.f32 %v2050, 1.442695
  %v2142 = vpow.pop %v2141
  %v2143 = vmul.f32 %v2051, 1.442695
  %v2144 = vpow.pop %v2143
  %v2145 = vmul.f32 %v2052, 1.442695
  %v2146 = vpow.pop %v2145
  %v2147 = vmul.f32 %v2053, 1.442695
  %v2148 = vpow.pop %v2147
  %v2149 = vmul.f32 %v2054, 1.442695
  %v2150 = vpow.pop %v2149
  %v2151 = vmul.f32 %v2055, 1.442695
  %v2152 = vpow.pop %v2151
  %v2153 = vmul.f32 %v2056, 1.442695
  %v2154 = vpow.pop %v2153
  %v2155 = vmul.f32 %v2057, 1.442695
  %v2156 = vpow.pop %v2155
  %v2157 = vmul.f32 %v2058, 1.442695
  %v2158 = vpow.pop %v2157
  %v2159 = vmul.f32 %v2059, 1.442695
  %v2160 = vpow.pop %v2159
  %v2161 = vmul.f32 %v2060, 1.442695
  %v2162 = vpow.pop %v2161
  %v2163 = vmul.f32 %v2061, 1.442695
  %v2164 = vpow.pop %v2163
  %v2165 = vmul.f32 %v2062, 1.442695
  %v2166 = vpow.pop %v2165
  %v2167 = vmul.f32 %v2063, 1.442695
  %v2168 = vpow.pop %v2167
  %v2169 = vmul.f32 %v2064, 1.442695
  %v2170 = vpow.pop %v2169
  %v2171 = vmul.f32 %v2065, 1.442695
  %v2172 = vpow.pop %v2171
  %v2173 = vmul.f32 %v2066, 1.442695
  %v2174 = vpow.pop %v2173
  %v2175 = vmul.f32 %v2067, 1.442695
  %v2176 = vpow.pop %v2175
  %v2177 = vmul.f32 %v2068, 1.442695
  %v2178 = vpow.pop %v2177
  %v2179 = vmul.f32 %v2069, 1.442695
  %v2180 = vpow.pop %v2179
  %v2181 = vmul.f32 %v2070, 1.442695
  %v2182 = vpow.pop %v2181
  %v2183 = vmul.f32 %v2071, 1.442695
  %v2184 = vpow.pop %v2183
  %v2185 = vmul.f32 %v2072, 1.442695
  %v2186 = vpow.pop %v2185
  %v2187 = vmul.f32 %v2073, 1.442695
  %v2188 = vpow.pop %v2187
  %v2189 = vmul.f32 %v2074, 1.442695
  %v2190 = vpow.pop %v2189
  %v2191 = vmul.f32 %v2075, 1.442695
  %v2192 = vpow.pop %v2191
  %v2193 = vmul.f32 %v2076, 1.442695
  %v2194 = vpow.pop %v2193
  %v2195 = vmul.f32 %v2077, 1.442695
  %v2196 = vpow.pop %v2195
  %v2197 = vmul.f32 %v2078, 1.442695
  %v2198 = vpow.pop %v2197
  %v2199 = vmul.f32 %v2079, 1.442695
  %v2200 = vpow.pop %v2199
  %v2201 = vmul.f32 %v2080, 1.442695
  %v2202 = vpow.pop %v2201
  %v2203 = vmul.f32 %v2081, 1.442695
  %v2204 = vpow.pop %v2203
  %v2205 = vmul.f32 %v2082, 1.442695
  %v2206 = vpow.pop %v2205
  %v2207 = vmul.f32 %v2083, 1.442695
  %v2208 = vpow.pop %v2207
  %v2209 = vmul.f32 %v2084, 1.442695
  %v2210 = vpow.pop %v2209
  %v2211 = vmul.f32 %v2085, 1.442695
  %v2212 = vpow.pop %v2211
  %v2213 = vmul.f32 %v2086, 1.442695
  %v2214 = vpow.pop %v2213
  %v2215 = vpack.c.bf16 %v2092, %v2088
  %v2216 = vpack.c.bf16 %v2094, %v2090
  %v2217 = vpack.c.bf16 %v2100, %v2096
  %v2218 = vpack.c.bf16 %v2102, %v2098
  %v2219 = vpack.c.bf16 %v2108, %v2104
  %v2220 = vpack.c.bf16 %v2110, %v2106
  %v2221 = vpack.c.bf16 %v2116, %v2112
  %v2222 = vpack.c.bf16 %v2118, %v2114
  %v2223 = vpack.c.bf16 %v2124, %v2120
  %v2224 = vpack.c.bf16 %v2126, %v2122
  %v2225 = vpack.c.bf16 %v2132, %v2128
  %v2226 = vpack.c.bf16 %v2134, %v2130
  %v2227 = vpack.c.bf16 %v2140, %v2136
  %v2228 = vpack.c.bf16 %v2142, %v2138
  %v2229 = vpack.c.bf16 %v2148, %v2144
  %v2230 = vpack.c.bf16 %v2150, %v2146
  %v2231 = vpack.c.bf16 %v2156, %v2152
  %v2232 = vpack.c.bf16 %v2158, %v2154
  %v2233 = vpack.c.bf16 %v2164, %v2160
  %v2234 = vpack.c.bf16 %v2166, %v2162
  %v2235 = vpack.c.bf16 %v2172, %v2168
  %v2236 = vpack.c.bf16 %v2174, %v2170
  %v2237 = vpack.c.bf16 %v2180, %v2176
  %v2238 = vpack.c.bf16 %v2182, %v2178
  %v2239 = vpack.c.bf16 %v2188, %v2184
  %v2240 = vpack.c.bf16 %v2190, %v2186
  %v2241 = vpack.c.bf16 %v2196, %v2192
  %v2242 = vpack.c.bf16 %v2198, %v2194
  %v2243 = vpack.c.bf16 %v2204, %v2200
  %v2244 = vpack.c.bf16 %v2206, %v2202
  %v2245 = vpack.c.bf16 %v2212, %v2208
  %v2246 = vpack.c.bf16 %v2214, %v2210
  %2247 = vmatprep.subr.bf16.mxu0 %v2230
  %2248 = vmatpush1.bf16.msra.mxu0 %v2229
  %2249 = vmatprep.subr.bf16.mxu0 %v2228
  %2250 = vmatpush1.bf16.msra.mxu0 %v2227
  %2251 = vmatprep.subr.bf16.mxu0 %v2226
  %2252 = vmatpush1.bf16.msra.mxu0 %v2225
  %2253 = vmatprep.subr.bf16.mxu0 %v2224
  %2254 = vmatpush1.bf16.msra.mxu0 %v2223
  %2255 = vmatprep.subr.bf16.mxu0 %v2222
  %2256 = vmatpush1.bf16.msra.mxu0 %v2221
  %2257 = vmatprep.subr.bf16.mxu0 %v2220
  %2258 = vmatpush1.bf16.msra.mxu0 %v2219
  %2259 = vmatprep.subr.bf16.mxu0 %v2218
  %2260 = vmatpush1.bf16.msra.mxu0 %v2217
  %2261 = vmatprep.subr.bf16.mxu0 %v2216
  %2262 = vmatpush1.bf16.msra.mxu0 %v2215
  %2263 = vmatprep.subr.bf16.mxu0 %v2246
  %2264 = vmatpush2.bf16.msra.mxu0 %v2245
  %2265 = vmatprep.subr.bf16.mxu0 %v2244
  %2266 = vmatpush2.bf16.msra.mxu0 %v2243
  %2267 = vmatprep.subr.bf16.mxu0 %v2242
  %2268 = vmatpush2.bf16.msra.mxu0 %v2241
  %2269 = vmatprep.subr.bf16.mxu0 %v2240
  %2270 = vmatpush2.bf16.msra.mxu0 %v2239
  %2271 = vmatprep.subr.bf16.mxu0 %v2238
  %2272 = vmatpush2.bf16.msra.mxu0 %v2237
  %2273 = vmatprep.subr.bf16.mxu0 %v2236
  %2274 = vmatpush2.bf16.msra.mxu0 %v2235
  %2275 = vmatprep.subr.bf16.mxu0 %v2234
  %2276 = vmatpush2.bf16.msra.mxu0 %v2233
  %2277 = vmatprep.subr.bf16.mxu0 %v2232
  %2278 = vmatpush2.bf16.msra.mxu0 %v2231
  %2279 = vmatprep.mubr.bf16.mxu0 %v1669
  %2280 = vmatmul.mubr.bf16.gmra.mxu0 %v1668
  %v2281 = vpop.f32.mrf.mxu0
  %v2282 = vadd.f32 0.0, %v2281
  %v2283 = vpop.f32.mrf.mxu0
  %v2284 = vadd.f32 0.0, %v2283
  %v2285 = vpop.f32.mrf.mxu0
  %v2286 = vpop.f32.mrf.mxu0
  %2287 = vdwg.mxu0
  %v2288 = vrcp.pop %v2282
  %v2289 = vrcp.pop %v2284
  %v2290 = vlaneseq
  %v2291 = vshrl.u32 %v2290, 7
  %v2292 = vsub.s32 4, %v2291
  %v2293 = vrot.slane %v2288, %v2292
  %v2294 = vlaneseq
  %v2295 = vshrl.u32 %v2294, 7
  %v2296 = vsub.s32 4, %v2295
  %v2297 = vrot.slane %v2289, %v2296
  %v2298 = vmul.f32 %v2282, %v2293
  %v2299 = vmul.f32 %v2284, %v2297
  %v2300 = vpack.c.bf16 %v1646, %v1646
  %v2301 = vpack.c.bf16 %v1648, %v1648
  %v2302 = vpack.c.bf16 %v1652, %v1652
  %v2303 = vpack.c.bf16 %v1654, %v1654
  %v2304 = vsel %vm22, 1.0, %v1658
  %v2305 = vsel %vm22, 1.0, %v1660
  %v2306 = vpack.c.bf16 %v2304, %v2304
  %v2307 = vpack.c.bf16 %v2305, %v2305
  %2308 = vxpose.xlu0.c.b16.start [1/8] %v2302, 128
  %2309 = vxpose.xlu0.c.b16.cont [2/8] 0, 128
  %2310 = vxpose.xlu0.c.b16.cont [3/8] 0, 128
  %2311 = vxpose.xlu0.c.b16.cont [4/8] 0, 128
  %2312 = vxpose.xlu0.c.b16.cont [5/8] 0, 128
  %2313 = vxpose.xlu0.c.b16.cont [6/8] 0, 128
  %2314 = vxpose.xlu0.c.b16.cont [7/8] 0, 128
  %2315 = vxpose.xlu0.c.b16.end [8/8] 0, 128
  %v2316 = vpop.trf.xlu0
  %v2317 = vpop.trf.xlu0
  %v2318 = vpop.trf.xlu0
  %v2319 = vpop.trf.xlu0
  %v2320 = vpop.trf.xlu0
  %v2321 = vpop.trf.xlu0
  %v2322 = vpop.trf.xlu0
  %v2323 = vpop.trf.xlu0
  %2324 = vxpose.xlu0.c.b16.start [1/8] %v2303, 128
  %2325 = vxpose.xlu0.c.b16.cont [2/8] 0, 128
  %2326 = vxpose.xlu0.c.b16.cont [3/8] 0, 128
  %2327 = vxpose.xlu0.c.b16.cont [4/8] 0, 128
  %2328 = vxpose.xlu0.c.b16.cont [5/8] 0, 128
  %2329 = vxpose.xlu0.c.b16.cont [6/8] 0, 128
  %2330 = vxpose.xlu0.c.b16.cont [7/8] 0, 128
  %2331 = vxpose.xlu0.c.b16.end [8/8] 0, 128
  %v2332 = vpop.trf.xlu0
  %v2333 = vpop.trf.xlu0
  %v2334 = vpop.trf.xlu0
  %v2335 = vpop.trf.xlu0
  %v2336 = vpop.trf.xlu0
  %v2337 = vpop.trf.xlu0
  %v2338 = vpop.trf.xlu0
  %v2339 = vpop.trf.xlu0
  %v2341 = vsel %vm30, %v2316, 0
  %v2344 = vsel %vm30, %v2317, 0
  %v2347 = vsel %vm30, %v2318, 0
  %v2350 = vsel %vm30, %v2319, 0
  %v2353 = vsel %vm30, %v2320, 0
  %v2356 = vsel %vm30, %v2321, 0
  %v2359 = vsel %vm30, %v2322, 0
  %v2362 = vsel %vm30, %v2323, 0
  %v2365 = vsel %vm30, %v2332, 0
  %v2368 = vsel %vm30, %v2333, 0
  %v2371 = vsel %vm30, %v2334, 0
  %v2374 = vsel %vm30, %v2335, 0
  %v2377 = vsel %vm30, %v2336, 0
  %v2380 = vsel %vm30, %v2337, 0
  %v2383 = vsel %vm30, %v2338, 0
  %v2386 = vsel %vm30, %v2339, 0
  %v2389 = vsel %vm294, %v2300, 0
  %v2392 = vsel %vm294, %v2301, 0
  %2394 = vmatprep.subr.bf16.mxu0 0
  %2395 = vmatpush1.bf16.msra.mxu0 0
  %2396 = vmatprep.subr.bf16.mxu0 0
  %2397 = vmatpush1.bf16.msra.mxu0 0
  %2398 = vmatprep.subr.bf16.mxu0 0
  %2399 = vmatpush1.bf16.msra.mxu0 0
  %2400 = vmatprep.subr.bf16.mxu0 0
  %2401 = vmatpush1.bf16.msra.mxu0 0
  %2402 = vmatprep.subr.bf16.mxu0 0
  %2403 = vmatpush1.bf16.msra.mxu0 0
  %2404 = vmatprep.subr.bf16.mxu0 0
  %2405 = vmatpush1.bf16.msra.mxu0 0
  %2406 = vmatprep.subr.bf16.mxu0 0
  %2407 = vmatpush1.bf16.msra.mxu0 0
  %2408 = vmatprep.subr.bf16.mxu0 %v2392
  %2409 = vmatpush1.bf16.msra.mxu0 %v2389
  %2410 = vmatprep.subr.bf16.mxu0 0
  %2411 = vmatpush2.bf16.msra.mxu0 0
  %2412 = vmatprep.subr.bf16.mxu0 0
  %2413 = vmatpush2.bf16.msra.mxu0 0
  %2414 = vmatprep.subr.bf16.mxu0 0
  %2415 = vmatpush2.bf16.msra.mxu0 0
  %2416 = vmatprep.subr.bf16.mxu0 0
  %2417 = vmatpush2.bf16.msra.mxu0 0
  %2418 = vmatprep.subr.bf16.mxu0 0
  %2419 = vmatpush2.bf16.msra.mxu0 0
  %2420 = vmatprep.subr.bf16.mxu0 0
  %2421 = vmatpush2.bf16.msra.mxu0 0
  %2422 = vmatprep.subr.bf16.mxu0 0
  %2423 = vmatpush2.bf16.msra.mxu0 0
  %2424 = vmatprep.subr.bf16.mxu0 0
  %2425 = vmatpush2.bf16.msra.mxu0 0
  %2426 = vmatprep.mubr.bf16.mxu0 0
  %2427 = vmatmul.mubr.bf16.gmra.mxu0 %v2341
  %v2428 = vpop.f32.mrf.mxu0
  %v2429 = vadd.f32 0.0, %v2428
  %v2430 = vpop.f32.mrf.mxu0
  %v2431 = vadd.f32 0.0, %v2430
  %v2432 = vpop.f32.mrf.mxu0
  %v2433 = vadd.f32 0.0, %v2432
  %v2434 = vpop.f32.mrf.mxu0
  %v2435 = vadd.f32 0.0, %v2434
  %2436 = vmatprep.mubr.bf16.mxu0 0
  %2437 = vmatmul.mubr.bf16.gmra.mxu0 %v2344
  %v2438 = vpop.f32.mrf.mxu0
  %v2439 = vadd.f32 0.0, %v2438
  %v2440 = vpop.f32.mrf.mxu0
  %v2441 = vadd.f32 0.0, %v2440
  %v2442 = vpop.f32.mrf.mxu0
  %v2443 = vadd.f32 0.0, %v2442
  %v2444 = vpop.f32.mrf.mxu0
  %v2445 = vadd.f32 0.0, %v2444
  %2446 = vmatprep.mubr.bf16.mxu0 0
  %2447 = vmatmul.mubr.bf16.gmra.mxu0 %v2347
  %v2448 = vpop.f32.mrf.mxu0
  %v2449 = vadd.f32 0.0, %v2448
  %v2450 = vpop.f32.mrf.mxu0
  %v2451 = vadd.f32 0.0, %v2450
  %v2452 = vpop.f32.mrf.mxu0
  %v2453 = vadd.f32 0.0, %v2452
  %v2454 = vpop.f32.mrf.mxu0
  %v2455 = vadd.f32 0.0, %v2454
  %2456 = vmatprep.mubr.bf16.mxu0 0
  %2457 = vmatmul.mubr.bf16.gmra.mxu0 %v2350
  %v2458 = vpop.f32.mrf.mxu0
  %v2459 = vadd.f32 0.0, %v2458
  %v2460 = vpop.f32.mrf.mxu0
  %v2461 = vadd.f32 0.0, %v2460
  %v2462 = vpop.f32.mrf.mxu0
  %v2463 = vadd.f32 0.0, %v2462
  %v2464 = vpop.f32.mrf.mxu0
  %v2465 = vadd.f32 0.0, %v2464
  %2466 = vmatprep.mubr.bf16.mxu0 0
  %2467 = vmatmul.mubr.bf16.gmra.mxu0 %v2353
  %v2468 = vpop.f32.mrf.mxu0
  %v2469 = vadd.f32 0.0, %v2468
  %v2470 = vpop.f32.mrf.mxu0
  %v2471 = vadd.f32 0.0, %v2470
  %v2472 = vpop.f32.mrf.mxu0
  %v2473 = vadd.f32 0.0, %v2472
  %v2474 = vpop.f32.mrf.mxu0
  %v2475 = vadd.f32 0.0, %v2474
  %2476 = vmatprep.mubr.bf16.mxu0 0
  %2477 = vmatmul.mubr.bf16.gmra.mxu0 %v2356
  %v2478 = vpop.f32.mrf.mxu0
  %v2479 = vadd.f32 0.0, %v2478
  %v2480 = vpop.f32.mrf.mxu0
  %v2481 = vadd.f32 0.0, %v2480
  %v2482 = vpop.f32.mrf.mxu0
  %v2483 = vadd.f32 0.0, %v2482
  %v2484 = vpop.f32.mrf.mxu0
  %v2485 = vadd.f32 0.0, %v2484
  %2486 = vmatprep.mubr.bf16.mxu0 0
  %2487 = vmatmul.mubr.bf16.gmra.mxu0 %v2359
  %v2488 = vpop.f32.mrf.mxu0
  %v2489 = vadd.f32 0.0, %v2488
  %v2490 = vpop.f32.mrf.mxu0
  %v2491 = vadd.f32 0.0, %v2490
  %v2492 = vpop.f32.mrf.mxu0
  %v2493 = vadd.f32 0.0, %v2492
  %v2494 = vpop.f32.mrf.mxu0
  %v2495 = vadd.f32 0.0, %v2494
  %2496 = vmatprep.mubr.bf16.mxu0 0
  %2497 = vmatmul.mubr.bf16.gmra.mxu0 %v2362
  %v2498 = vpop.f32.mrf.mxu0
  %v2499 = vadd.f32 0.0, %v2498
  %v2500 = vpop.f32.mrf.mxu0
  %v2501 = vadd.f32 0.0, %v2500
  %v2502 = vpop.f32.mrf.mxu0
  %v2503 = vadd.f32 0.0, %v2502
  %v2504 = vpop.f32.mrf.mxu0
  %v2505 = vadd.f32 0.0, %v2504
  %2506 = vmatprep.mubr.bf16.mxu0 0
  %2507 = vmatmul.mubr.bf16.gmra.mxu0 %v2365
  %v2508 = vpop.f32.mrf.mxu0
  %v2509 = vadd.f32 0.0, %v2508
  %v2510 = vpop.f32.mrf.mxu0
  %v2511 = vadd.f32 0.0, %v2510
  %v2512 = vpop.f32.mrf.mxu0
  %v2513 = vadd.f32 0.0, %v2512
  %v2514 = vpop.f32.mrf.mxu0
  %v2515 = vadd.f32 0.0, %v2514
  %2516 = vmatprep.mubr.bf16.mxu0 0
  %2517 = vmatmul.mubr.bf16.gmra.mxu0 %v2368
  %v2518 = vpop.f32.mrf.mxu0
  %v2519 = vadd.f32 0.0, %v2518
  %v2520 = vpop.f32.mrf.mxu0
  %v2521 = vadd.f32 0.0, %v2520
  %v2522 = vpop.f32.mrf.mxu0
  %v2523 = vadd.f32 0.0, %v2522
  %v2524 = vpop.f32.mrf.mxu0
  %v2525 = vadd.f32 0.0, %v2524
  %2526 = vmatprep.mubr.bf16.mxu0 0
  %2527 = vmatmul.mubr.bf16.gmra.mxu0 %v2371
  %v2528 = vpop.f32.mrf.mxu0
  %v2529 = vadd.f32 0.0, %v2528
  %v2530 = vpop.f32.mrf.mxu0
  %v2531 = vadd.f32 0.0, %v2530
  %v2532 = vpop.f32.mrf.mxu0
  %v2533 = vadd.f32 0.0, %v2532
  %v2534 = vpop.f32.mrf.mxu0
  %v2535 = vadd.f32 0.0, %v2534
  %2536 = vmatprep.mubr.bf16.mxu0 0
  %2537 = vmatmul.mubr.bf16.gmra.mxu0 %v2374
  %v2538 = vpop.f32.mrf.mxu0
  %v2539 = vadd.f32 0.0, %v2538
  %v2540 = vpop.f32.mrf.mxu0
  %v2541 = vadd.f32 0.0, %v2540
  %v2542 = vpop.f32.mrf.mxu0
  %v2543 = vadd.f32 0.0, %v2542
  %v2544 = vpop.f32.mrf.mxu0
  %v2545 = vadd.f32 0.0, %v2544
  %2546 = vmatprep.mubr.bf16.mxu0 0
  %2547 = vmatmul.mubr.bf16.gmra.mxu0 %v2377
  %v2548 = vpop.f32.mrf.mxu0
  %v2549 = vadd.f32 0.0, %v2548
  %v2550 = vpop.f32.mrf.mxu0
  %v2551 = vadd.f32 0.0, %v2550
  %v2552 = vpop.f32.mrf.mxu0
  %v2553 = vadd.f32 0.0, %v2552
  %v2554 = vpop.f32.mrf.mxu0
  %v2555 = vadd.f32 0.0, %v2554
  %2556 = vmatprep.mubr.bf16.mxu0 0
  %2557 = vmatmul.mubr.bf16.gmra.mxu0 %v2380
  %v2558 = vpop.f32.mrf.mxu0
  %v2559 = vadd.f32 0.0, %v2558
  %v2560 = vpop.f32.mrf.mxu0
  %v2561 = vadd.f32 0.0, %v2560
  %v2562 = vpop.f32.mrf.mxu0
  %v2563 = vadd.f32 0.0, %v2562
  %v2564 = vpop.f32.mrf.mxu0
  %v2565 = vadd.f32 0.0, %v2564
  %2566 = vmatprep.mubr.bf16.mxu0 0
  %2567 = vmatmul.mubr.bf16.gmra.mxu0 %v2383
  %v2568 = vpop.f32.mrf.mxu0
  %v2569 = vadd.f32 0.0, %v2568
  %v2570 = vpop.f32.mrf.mxu0
  %v2571 = vadd.f32 0.0, %v2570
  %v2572 = vpop.f32.mrf.mxu0
  %v2573 = vadd.f32 0.0, %v2572
  %v2574 = vpop.f32.mrf.mxu0
  %v2575 = vadd.f32 0.0, %v2574
  %2576 = vmatprep.mubr.bf16.mxu0 0
  %2577 = vmatmul.mubr.bf16.gmra.mxu0 %v2386
  %v2578 = vpop.f32.mrf.mxu0
  %v2579 = vadd.f32 0.0, %v2578
  %v2580 = vpop.f32.mrf.mxu0
  %v2581 = vadd.f32 0.0, %v2580
  %v2582 = vpop.f32.mrf.mxu0
  %v2583 = vadd.f32 0.0, %v2582
  %v2584 = vpop.f32.mrf.mxu0
  %v2585 = vadd.f32 0.0, %v2584
  %2586 = vdwg.mxu0
  %v2587 = vmax.f32 %v2429, %v2439
  %v2588 = vmax.f32 %v2433, %v2443
  %v2589 = vmax.f32 %v2587, %v2449
  %v2590 = vmax.f32 %v2588, %v2453
  %v2591 = vmax.f32 %v2589, %v2459
  %v2592 = vmax.f32 %v2590, %v2463
  %v2593 = vmax.f32 %v2591, %v2469
  %v2594 = vmax.f32 %v2592, %v2473
  %v2595 = vmax.f32 %v2593, %v2479
  %v2596 = vmax.f32 %v2594, %v2483
  %v2597 = vmax.f32 %v2595, %v2489
  %v2598 = vmax.f32 %v2596, %v2493
  %v2599 = vmax.f32 %v2597, %v2499
  %v2600 = vmax.f32 %v2598, %v2503
  %v2601 = vmax.f32 %v2599, %v2509
  %v2602 = vmax.f32 %v2600, %v2513
  %v2603 = vmax.f32 %v2601, %v2519
  %v2604 = vmax.f32 %v2602, %v2523
  %v2605 = vmax.f32 %v2603, %v2529
  %v2606 = vmax.f32 %v2604, %v2533
  %v2607 = vmax.f32 %v2605, %v2539
  %v2608 = vmax.f32 %v2606, %v2543
  %v2609 = vmax.f32 %v2607, %v2549
  %v2610 = vmax.f32 %v2608, %v2553
  %v2611 = vmax.f32 %v2609, %v2559
  %v2612 = vmax.f32 %v2610, %v2563
  %v2613 = vmax.f32 %v2611, %v2569
  %v2614 = vmax.f32 %v2612, %v2573
  %v2615 = vmax.f32 %v2613, %v2579
  %v2616 = vmax.f32 %v2614, %v2583
  %v2617 = vmax.f32 %v2615, %v2616
  %v2618 = vrot.slane %v2617, 4
  %v2619 = vmax.f32 %v2617, %v2618
  %v2620 = vrot.slane %v2619, 2
  %v2621 = vmax.f32 %v2619, %v2620
  %v2622 = vrot.slane %v2621, 1
  %v2623 = vmax.f32 %v2621, %v2622
  %v2624 = vmax.f32 %v2431, %v2441
  %v2625 = vmax.f32 %v2435, %v2445
  %v2626 = vmax.f32 %v2624, %v2451
  %v2627 = vmax.f32 %v2625, %v2455
  %v2628 = vmax.f32 %v2626, %v2461
  %v2629 = vmax.f32 %v2627, %v2465
  %v2630 = vmax.f32 %v2628, %v2471
  %v2631 = vmax.f32 %v2629, %v2475
  %v2632 = vmax.f32 %v2630, %v2481
  %v2633 = vmax.f32 %v2631, %v2485
  %v2634 = vmax.f32 %v2632, %v2491
  %v2635 = vmax.f32 %v2633, %v2495
  %v2636 = vmax.f32 %v2634, %v2501
  %v2637 = vmax.f32 %v2635, %v2505
  %v2638 = vmax.f32 %v2636, %v2511
  %v2639 = vmax.f32 %v2637, %v2515
  %v2640 = vmax.f32 %v2638, %v2521
  %v2641 = vmax.f32 %v2639, %v2525
  %v2642 = vmax.f32 %v2640, %v2531
  %v2643 = vmax.f32 %v2641, %v2535
  %v2644 = vmax.f32 %v2642, %v2541
  %v2645 = vmax.f32 %v2643, %v2545
  %v2646 = vmax.f32 %v2644, %v2551
  %v2647 = vmax.f32 %v2645, %v2555
  %v2648 = vmax.f32 %v2646, %v2561
  %v2649 = vmax.f32 %v2647, %v2565
  %v2650 = vmax.f32 %v2648, %v2571
  %v2651 = vmax.f32 %v2649, %v2575
  %v2652 = vmax.f32 %v2650, %v2581
  %v2653 = vmax.f32 %v2651, %v2585
  %v2654 = vmax.f32 %v2652, %v2653
  %v2655 = vrot.slane %v2654, 4
  %v2656 = vmax.f32 %v2654, %v2655
  %v2657 = vrot.slane %v2656, 2
  %v2658 = vmax.f32 %v2656, %v2657
  %v2659 = vrot.slane %v2658, 1
  %v2660 = vmax.f32 %v2658, %v2659
  %v2661 = vsub.f32 %v2429, %v2623
  %v2662 = vsub.f32 %v2431, %v2660
  %v2663 = vsub.f32 %v2433, %v2623
  %v2664 = vsub.f32 %v2435, %v2660
  %v2665 = vsub.f32 %v2439, %v2623
  %v2666 = vsub.f32 %v2441, %v2660
  %v2667 = vsub.f32 %v2443, %v2623
  %v2668 = vsub.f32 %v2445, %v2660
  %v2669 = vsub.f32 %v2449, %v2623
  %v2670 = vsub.f32 %v2451, %v2660
  %v2671 = vsub.f32 %v2453, %v2623
  %v2672 = vsub.f32 %v2455, %v2660
  %v2673 = vsub.f32 %v2459, %v2623
  %v2674 = vsub.f32 %v2461, %v2660
  %v2675 = vsub.f32 %v2463, %v2623
  %v2676 = vsub.f32 %v2465, %v2660
  %v2677 = vsub.f32 %v2469, %v2623
  %v2678 = vsub.f32 %v2471, %v2660
  %v2679 = vsub.f32 %v2473, %v2623
  %v2680 = vsub.f32 %v2475, %v2660
  %v2681 = vsub.f32 %v2479, %v2623
  %v2682 = vsub.f32 %v2481, %v2660
  %v2683 = vsub.f32 %v2483, %v2623
  %v2684 = vsub.f32 %v2485, %v2660
  %v2685 = vsub.f32 %v2489, %v2623
  %v2686 = vsub.f32 %v2491, %v2660
  %v2687 = vsub.f32 %v2493, %v2623
  %v2688 = vsub.f32 %v2495, %v2660
  %v2689 = vsub.f32 %v2499, %v2623
  %v2690 = vsub.f32 %v2501, %v2660
  %v2691 = vsub.f32 %v2503, %v2623
  %v2692 = vsub.f32 %v2505, %v2660
  %v2693 = vsub.f32 %v2509, %v2623
  %v2694 = vsub.f32 %v2511, %v2660
  %v2695 = vsub.f32 %v2513, %v2623
  %v2696 = vsub.f32 %v2515, %v2660
  %v2697 = vsub.f32 %v2519, %v2623
  %v2698 = vsub.f32 %v2521, %v2660
  %v2699 = vsub.f32 %v2523, %v2623
  %v2700 = vsub.f32 %v2525, %v2660
  %v2701 = vsub.f32 %v2529, %v2623
  %v2702 = vsub.f32 %v2531, %v2660
  %v2703 = vsub.f32 %v2533, %v2623
  %v2704 = vsub.f32 %v2535, %v2660
  %v2705 = vsub.f32 %v2539, %v2623
  %v2706 = vsub.f32 %v2541, %v2660
  %v2707 = vsub.f32 %v2543, %v2623
  %v2708 = vsub.f32 %v2545, %v2660
  %v2709 = vsub.f32 %v2549, %v2623
  %v2710 = vsub.f32 %v2551, %v2660
  %v2711 = vsub.f32 %v2553, %v2623
  %v2712 = vsub.f32 %v2555, %v2660
  %v2713 = vsub.f32 %v2559, %v2623
  %v2714 = vsub.f32 %v2561, %v2660
  %v2715 = vsub.f32 %v2563, %v2623
  %v2716 = vsub.f32 %v2565, %v2660
  %v2717 = vsub.f32 %v2569, %v2623
  %v2718 = vsub.f32 %v2571, %v2660
  %v2719 = vsub.f32 %v2573, %v2623
  %v2720 = vsub.f32 %v2575, %v2660
  %v2721 = vsub.f32 %v2579, %v2623
  %v2722 = vsub.f32 %v2581, %v2660
  %v2723 = vsub.f32 %v2583, %v2623
  %v2724 = vsub.f32 %v2585, %v2660
  %v2725 = vmul.f32 %v2661, 1.442695
  %v2726 = vpow.pop %v2725
  %v2727 = vmul.f32 %v2662, 1.442695
  %v2728 = vpow.pop %v2727
  %v2729 = vmul.f32 %v2663, 1.442695
  %v2730 = vpow.pop %v2729
  %v2731 = vmul.f32 %v2664, 1.442695
  %v2732 = vpow.pop %v2731
  %v2733 = vmul.f32 %v2665, 1.442695
  %v2734 = vpow.pop %v2733
  %v2735 = vmul.f32 %v2666, 1.442695
  %v2736 = vpow.pop %v2735
  %v2737 = vmul.f32 %v2667, 1.442695
  %v2738 = vpow.pop %v2737
  %v2739 = vmul.f32 %v2668, 1.442695
  %v2740 = vpow.pop %v2739
  %v2741 = vmul.f32 %v2669, 1.442695
  %v2742 = vpow.pop %v2741
  %v2743 = vmul.f32 %v2670, 1.442695
  %v2744 = vpow.pop %v2743
  %v2745 = vmul.f32 %v2671, 1.442695
  %v2746 = vpow.pop %v2745
  %v2747 = vmul.f32 %v2672, 1.442695
  %v2748 = vpow.pop %v2747
  %v2749 = vmul.f32 %v2673, 1.442695
  %v2750 = vpow.pop %v2749
  %v2751 = vmul.f32 %v2674, 1.442695
  %v2752 = vpow.pop %v2751
  %v2753 = vmul.f32 %v2675, 1.442695
  %v2754 = vpow.pop %v2753
  %v2755 = vmul.f32 %v2676, 1.442695
  %v2756 = vpow.pop %v2755
  %v2757 = vmul.f32 %v2677, 1.442695
  %v2758 = vpow.pop %v2757
  %v2759 = vmul.f32 %v2678, 1.442695
  %v2760 = vpow.pop %v2759
  %v2761 = vmul.f32 %v2679, 1.442695
  %v2762 = vpow.pop %v2761
  %v2763 = vmul.f32 %v2680, 1.442695
  %v2764 = vpow.pop %v2763
  %v2765 = vmul.f32 %v2681, 1.442695
  %v2766 = vpow.pop %v2765
  %v2767 = vmul.f32 %v2682, 1.442695
  %v2768 = vpow.pop %v2767
  %v2769 = vmul.f32 %v2683, 1.442695
  %v2770 = vpow.pop %v2769
  %v2771 = vmul.f32 %v2684, 1.442695
  %v2772 = vpow.pop %v2771
  %v2773 = vmul.f32 %v2685, 1.442695
  %v2774 = vpow.pop %v2773
  %v2775 = vmul.f32 %v2686, 1.442695
  %v2776 = vpow.pop %v2775
  %v2777 = vmul.f32 %v2687, 1.442695
  %v2778 = vpow.pop %v2777
  %v2779 = vmul.f32 %v2688, 1.442695
  %v2780 = vpow.pop %v2779
  %v2781 = vmul.f32 %v2689, 1.442695
  %v2782 = vpow.pop %v2781
  %v2783 = vmul.f32 %v2690, 1.442695
  %v2784 = vpow.pop %v2783
  %v2785 = vmul.f32 %v2691, 1.442695
  %v2786 = vpow.pop %v2785
  %v2787 = vmul.f32 %v2692, 1.442695
  %v2788 = vpow.pop %v2787
  %v2789 = vmul.f32 %v2693, 1.442695
  %v2790 = vpow.pop %v2789
  %v2791 = vmul.f32 %v2694, 1.442695
  %v2792 = vpow.pop %v2791
  %v2793 = vmul.f32 %v2695, 1.442695
  %v2794 = vpow.pop %v2793
  %v2795 = vmul.f32 %v2696, 1.442695
  %v2796 = vpow.pop %v2795
  %v2797 = vmul.f32 %v2697, 1.442695
  %v2798 = vpow.pop %v2797
  %v2799 = vmul.f32 %v2698, 1.442695
  %v2800 = vpow.pop %v2799
  %v2801 = vmul.f32 %v2699, 1.442695
  %v2802 = vpow.pop %v2801
  %v2803 = vmul.f32 %v2700, 1.442695
  %v2804 = vpow.pop %v2803
  %v2805 = vmul.f32 %v2701, 1.442695
  %v2806 = vpow.pop %v2805
  %v2807 = vmul.f32 %v2702, 1.442695
  %v2808 = vpow.pop %v2807
  %v2809 = vmul.f32 %v2703, 1.442695
  %v2810 = vpow.pop %v2809
  %v2811 = vmul.f32 %v2704, 1.442695
  %v2812 = vpow.pop %v2811
  %v2813 = vmul.f32 %v2705, 1.442695
  %v2814 = vpow.pop %v2813
  %v2815 = vmul.f32 %v2706, 1.442695
  %v2816 = vpow.pop %v2815
  %v2817 = vmul.f32 %v2707, 1.442695
  %v2818 = vpow.pop %v2817
  %v2819 = vmul.f32 %v2708, 1.442695
  %v2820 = vpow.pop %v2819
  %v2821 = vmul.f32 %v2709, 1.442695
  %v2822 = vpow.pop %v2821
  %v2823 = vmul.f32 %v2710, 1.442695
  %v2824 = vpow.pop %v2823
  %v2825 = vmul.f32 %v2711, 1.442695
  %v2826 = vpow.pop %v2825
  %v2827 = vmul.f32 %v2712, 1.442695
  %v2828 = vpow.pop %v2827
  %v2829 = vmul.f32 %v2713, 1.442695
  %v2830 = vpow.pop %v2829
  %v2831 = vmul.f32 %v2714, 1.442695
  %v2832 = vpow.pop %v2831
  %v2833 = vmul.f32 %v2715, 1.442695
  %v2834 = vpow.pop %v2833
  %v2835 = vmul.f32 %v2716, 1.442695
  %v2836 = vpow.pop %v2835
  %v2837 = vmul.f32 %v2717, 1.442695
  %v2838 = vpow.pop %v2837
  %v2839 = vmul.f32 %v2718, 1.442695
  %v2840 = vpow.pop %v2839
  %v2841 = vmul.f32 %v2719, 1.442695
  %v2842 = vpow.pop %v2841
  %v2843 = vmul.f32 %v2720, 1.442695
  %v2844 = vpow.pop %v2843
  %v2845 = vmul.f32 %v2721, 1.442695
  %v2846 = vpow.pop %v2845
  %v2847 = vmul.f32 %v2722, 1.442695
  %v2848 = vpow.pop %v2847
  %v2849 = vmul.f32 %v2723, 1.442695
  %v2850 = vpow.pop %v2849
  %v2851 = vmul.f32 %v2724, 1.442695
  %v2852 = vpow.pop %v2851
  %v2853 = vpack.c.bf16 %v2730, %v2726
  %v2854 = vpack.c.bf16 %v2732, %v2728
  %v2855 = vpack.c.bf16 %v2738, %v2734
  %v2856 = vpack.c.bf16 %v2740, %v2736
  %v2857 = vpack.c.bf16 %v2746, %v2742
  %v2858 = vpack.c.bf16 %v2748, %v2744
  %v2859 = vpack.c.bf16 %v2754, %v2750
  %v2860 = vpack.c.bf16 %v2756, %v2752
  %v2861 = vpack.c.bf16 %v2762, %v2758
  %v2862 = vpack.c.bf16 %v2764, %v2760
  %v2863 = vpack.c.bf16 %v2770, %v2766
  %v2864 = vpack.c.bf16 %v2772, %v2768
  %v2865 = vpack.c.bf16 %v2778, %v2774
  %v2866 = vpack.c.bf16 %v2780, %v2776
  %v2867 = vpack.c.bf16 %v2786, %v2782
  %v2868 = vpack.c.bf16 %v2788, %v2784
  %v2869 = vpack.c.bf16 %v2794, %v2790
  %v2870 = vpack.c.bf16 %v2796, %v2792
  %v2871 = vpack.c.bf16 %v2802, %v2798
  %v2872 = vpack.c.bf16 %v2804, %v2800
  %v2873 = vpack.c.bf16 %v2810, %v2806
  %v2874 = vpack.c.bf16 %v2812, %v2808
  %v2875 = vpack.c.bf16 %v2818, %v2814
  %v2876 = vpack.c.bf16 %v2820, %v2816
  %v2877 = vpack.c.bf16 %v2826, %v2822
  %v2878 = vpack.c.bf16 %v2828, %v2824
  %v2879 = vpack.c.bf16 %v2834, %v2830
  %v2880 = vpack.c.bf16 %v2836, %v2832
  %v2881 = vpack.c.bf16 %v2842, %v2838
  %v2882 = vpack.c.bf16 %v2844, %v2840
  %v2883 = vpack.c.bf16 %v2850, %v2846
  %v2884 = vpack.c.bf16 %v2852, %v2848
  %2885 = vmatprep.subr.bf16.mxu0 %v2868
  %2886 = vmatpush1.bf16.msra.mxu0 %v2867
  %2887 = vmatprep.subr.bf16.mxu0 %v2866
  %2888 = vmatpush1.bf16.msra.mxu0 %v2865
  %2889 = vmatprep.subr.bf16.mxu0 %v2864
  %2890 = vmatpush1.bf16.msra.mxu0 %v2863
  %2891 = vmatprep.subr.bf16.mxu0 %v2862
  %2892 = vmatpush1.bf16.msra.mxu0 %v2861
  %2893 = vmatprep.subr.bf16.mxu0 %v2860
  %2894 = vmatpush1.bf16.msra.mxu0 %v2859
  %2895 = vmatprep.subr.bf16.mxu0 %v2858
  %2896 = vmatpush1.bf16.msra.mxu0 %v2857
  %2897 = vmatprep.subr.bf16.mxu0 %v2856
  %2898 = vmatpush1.bf16.msra.mxu0 %v2855
  %2899 = vmatprep.subr.bf16.mxu0 %v2854
  %2900 = vmatpush1.bf16.msra.mxu0 %v2853
  %2901 = vmatprep.subr.bf16.mxu0 %v2884
  %2902 = vmatpush2.bf16.msra.mxu0 %v2883
  %2903 = vmatprep.subr.bf16.mxu0 %v2882
  %2904 = vmatpush2.bf16.msra.mxu0 %v2881
  %2905 = vmatprep.subr.bf16.mxu0 %v2880
  %2906 = vmatpush2.bf16.msra.mxu0 %v2879
  %2907 = vmatprep.subr.bf16.mxu0 %v2878
  %2908 = vmatpush2.bf16.msra.mxu0 %v2877
  %2909 = vmatprep.subr.bf16.mxu0 %v2876
  %2910 = vmatpush2.bf16.msra.mxu0 %v2875
  %2911 = vmatprep.subr.bf16.mxu0 %v2874
  %2912 = vmatpush2.bf16.msra.mxu0 %v2873
  %2913 = vmatprep.subr.bf16.mxu0 %v2872
  %2914 = vmatpush2.bf16.msra.mxu0 %v2871
  %2915 = vmatprep.subr.bf16.mxu0 %v2870
  %2916 = vmatpush2.bf16.msra.mxu0 %v2869
  %2917 = vmatprep.mubr.bf16.mxu0 %v2307
  %2918 = vmatmul.mubr.bf16.gmra.mxu0 %v2306
  %v2919 = vpop.f32.mrf.mxu0
  %v2920 = vadd.f32 0.0, %v2919
  %v2921 = vpop.f32.mrf.mxu0
  %v2922 = vadd.f32 0.0, %v2921
  %v2923 = vpop.f32.mrf.mxu0
  %v2924 = vpop.f32.mrf.mxu0
  %2925 = vdwg.mxu0
  %v2926 = vrcp.pop %v2920
  %v2927 = vrcp.pop %v2922
  %v2928 = vlaneseq
  %v2929 = vshrl.u32 %v2928, 7
  %v2930 = vsub.s32 4, %v2929
  %v2931 = vrot.slane %v2926, %v2930
  %v2932 = vlaneseq
  %v2933 = vshrl.u32 %v2932, 7
  %v2934 = vsub.s32 4, %v2933
  %v2935 = vrot.slane %v2927, %v2934
  %v2936 = vmul.f32 %v2920, %v2931
  %v2937 = vmul.f32 %v2922, %v2935
  %v2938 = vld [vmem:[%s2] sm:$0x1]
  %v2939 = vstv %s19
  %v2941 = vsel %vm30, %v2938, 0
  %2943 = vmatprep.subr.mxu0 0.0
  %2944 = vmatpush1.msra.mxu0 0.0
  %2945 = vmatprep.subr.mxu0 0.0
  %2946 = vmatpush1.msra.mxu0 0.0
  %2947 = vmatprep.subr.mxu0 0.0
  %2948 = vmatpush1.msra.mxu0 0.0
  %2949 = vmatprep.subr.mxu0 0.0
  %2950 = vmatpush1.msra.mxu0 0.0
  %2951 = vmatprep.subr.mxu0 0.0
  %2952 = vmatpush1.msra.mxu0 0.0
  %2953 = vmatprep.subr.mxu0 0.0
  %2954 = vmatpush1.msra.mxu0 0.0
  %2955 = vmatprep.subr.mxu0 0.0
  %2956 = vmatpush1.msra.mxu0 0.0
  %2957 = vmatprep.subr.mxu0 0.0
  %2958 = vmatpush1.msra.mxu0 0.0
  %2959 = vmatprep.subr.mxu0 0.0
  %2960 = vmatpush1.msra.mxu0 0.0
  %2961 = vmatprep.subr.mxu0 0.0
  %2962 = vmatpush1.msra.mxu0 0.0
  %2963 = vmatprep.subr.mxu0 0.0
  %2964 = vmatpush1.msra.mxu0 0.0
  %2965 = vmatprep.subr.mxu0 0.0
  %2966 = vmatpush1.msra.mxu0 0.0
  %2967 = vmatprep.subr.mxu0 0.0
  %2968 = vmatpush1.msra.mxu0 0.0
  %2969 = vmatprep.subr.mxu0 0.0
  %2970 = vmatpush1.msra.mxu0 0.0
  %2971 = vmatprep.subr.mxu0 0.0
  %2972 = vmatpush1.msra.mxu0 0.0
  %2973 = vmatprep.subr.mxu0 %v2299
  %2974 = vmatpush1.msra.mxu0 %v2298
  %2975 = vmatprep.subr.mxu0 0.0
  %2976 = vmatpush2.msra.mxu0 0.0
  %2977 = vmatprep.subr.mxu0 0.0
  %2978 = vmatpush2.msra.mxu0 0.0
  %2979 = vmatprep.subr.mxu0 0.0
  %2980 = vmatpush2.msra.mxu0 0.0
  %2981 = vmatprep.subr.mxu0 0.0
  %2982 = vmatpush2.msra.mxu0 0.0
  %2983 = vmatprep.subr.mxu0 0.0
  %2984 = vmatpush2.msra.mxu0 0.0
  %2985 = vmatprep.subr.mxu0 0.0
  %2986 = vmatpush2.msra.mxu0 0.0
  %2987 = vmatprep.subr.mxu0 0.0
  %2988 = vmatpush2.msra.mxu0 0.0
  %2989 = vmatprep.subr.mxu0 0.0
  %2990 = vmatpush2.msra.mxu0 0.0
  %2991 = vmatprep.subr.mxu0 0.0
  %2992 = vmatpush2.msra.mxu0 0.0
  %2993 = vmatprep.subr.mxu0 0.0
  %2994 = vmatpush2.msra.mxu0 0.0
  %2995 = vmatprep.subr.mxu0 0.0
  %2996 = vmatpush2.msra.mxu0 0.0
  %2997 = vmatprep.subr.mxu0 0.0
  %2998 = vmatpush2.msra.mxu0 0.0
  %2999 = vmatprep.subr.mxu0 0.0
  %3000 = vmatpush2.msra.mxu0 0.0
  %3001 = vmatprep.subr.mxu0 0.0
  %3002 = vmatpush2.msra.mxu0 0.0
  %3003 = vmatprep.subr.mxu0 0.0
  %3004 = vmatpush2.msra.mxu0 0.0
  %3005 = vmatprep.subr.mxu0 0.0
  %3006 = vmatpush2.msra.mxu0 0.0
  %3007 = vmatprep.mubr.f32.mxu0 0.0
  %3008 = vmatmul.mubr.f32.gmra.mxu0 %v2941
  %v3009 = vpop.f32.mrf.mxu0
  %v3010 = vadd.f32 %v2939, %v3009
  %v3011 = vpop.f32.mrf.mxu0
  %v3012 = vadd.f32 %v2939, %v3011
  %3013 = vdwg.mxu0
  %3014 = vmatprep.subr.mxu0 0.0
  %3015 = vmatpush1.msra.mxu0 0.0
  %3016 = vmatprep.subr.mxu0 0.0
  %3017 = vmatpush1.msra.mxu0 0.0
  %3018 = vmatprep.subr.mxu0 0.0
  %3019 = vmatpush1.msra.mxu0 0.0
  %3020 = vmatprep.subr.mxu0 0.0
  %3021 = vmatpush1.msra.mxu0 0.0
  %3022 = vmatprep.subr.mxu0 0.0
  %3023 = vmatpush1.msra.mxu0 0.0
  %3024 = vmatprep.subr.mxu0 0.0
  %3025 = vmatpush1.msra.mxu0 0.0
  %3026 = vmatprep.subr.mxu0 0.0
  %3027 = vmatpush1.msra.mxu0 0.0
  %3028 = vmatprep.subr.mxu0 0.0
  %3029 = vmatpush1.msra.mxu0 0.0
  %3030 = vmatprep.subr.mxu0 0.0
  %3031 = vmatpush1.msra.mxu0 0.0
  %3032 = vmatprep.subr.mxu0 0.0
  %3033 = vmatpush1.msra.mxu0 0.0
  %3034 = vmatprep.subr.mxu0 0.0
  %3035 = vmatpush1.msra.mxu0 0.0
  %3036 = vmatprep.subr.mxu0 0.0
  %3037 = vmatpush1.msra.mxu0 0.0
  %3038 = vmatprep.subr.mxu0 0.0
  %3039 = vmatpush1.msra.mxu0 0.0
  %3040 = vmatprep.subr.mxu0 0.0
  %3041 = vmatpush1.msra.mxu0 0.0
  %3042 = vmatprep.subr.mxu0 0.0
  %3043 = vmatpush1.msra.mxu0 0.0
  %3044 = vmatprep.subr.mxu0 %v2937
  %3045 = vmatpush1.msra.mxu0 %v2936
  %3046 = vmatprep.subr.mxu0 0.0
  %3047 = vmatpush2.msra.mxu0 0.0
  %3048 = vmatprep.subr.mxu0 0.0
  %3049 = vmatpush2.msra.mxu0 0.0
  %3050 = vmatprep.subr.mxu0 0.0
  %3051 = vmatpush2.msra.mxu0 0.0
  %3052 = vmatprep.subr.mxu0 0.0
  %3053 = vmatpush2.msra.mxu0 0.0
  %3054 = vmatprep.subr.mxu0 0.0
  %3055 = vmatpush2.msra.mxu0 0.0
  %3056 = vmatprep.subr.mxu0 0.0
  %3057 = vmatpush2.msra.mxu0 0.0
  %3058 = vmatprep.subr.mxu0 0.0
  %3059 = vmatpush2.msra.mxu0 0.0
  %3060 = vmatprep.subr.mxu0 0.0
  %3061 = vmatpush2.msra.mxu0 0.0
  %3062 = vmatprep.subr.mxu0 0.0
  %3063 = vmatpush2.msra.mxu0 0.0
  %3064 = vmatprep.subr.mxu0 0.0
  %3065 = vmatpush2.msra.mxu0 0.0
  %3066 = vmatprep.subr.mxu0 0.0
  %3067 = vmatpush2.msra.mxu0 0.0
  %3068 = vmatprep.subr.mxu0 0.0
  %3069 = vmatpush2.msra.mxu0 0.0
  %3070 = vmatprep.subr.mxu0 0.0
  %3071 = vmatpush2.msra.mxu0 0.0
  %3072 = vmatprep.subr.mxu0 0.0
  %3073 = vmatpush2.msra.mxu0 0.0
  %3074 = vmatprep.subr.mxu0 0.0
  %3075 = vmatpush2.msra.mxu0 0.0
  %3076 = vmatprep.subr.mxu0 0.0
  %3077 = vmatpush2.msra.mxu0 0.0
  %3078 = vmatprep.mubr.f32.mxu0 0.0
  %3079 = vmatmul.mubr.f32.gmra.mxu0 %v2941
  %v3080 = vpop.f32.mrf.mxu0
  %v3081 = vadd.f32 %v2939, %v3080
  %v3082 = vpop.f32.mrf.mxu0
  %v3083 = vadd.f32 %v2939, %v3082
  %3084 = vdwg.mxu0
  %v3089 = vcombine.low %v3010, %v3012
  %v3090 = vcombine.low %v3081, %v3083
  %v3092 = vunpack.c.l.s4 1966171168
  %v3093 = vunpack.c.0.s8 %v3092
  %v3094 = vlaneseq
  %v3095 = vshrl.u32 %v3094, 7
  %v3096 = vsub.s32 %v3093, %v3095
  %v3097 = vrot.slane %v3089, %v3096
  %v3099 = vunpack.c.l.s4 1966171168
  %v3100 = vunpack.c.0.s8 %v3099
  %v3101 = vlaneseq
  %v3102 = vshrl.u32 %v3101, 7
  %v3103 = vsub.s32 %v3100, %v3102
  %v3104 = vrot.slane %v3090, %v3103
  %v3105 = vcombine.low %v3097, %v3104
  %v3107 = vunpack.c.l.s4 1966171168
  %v3108 = vunpack.c.0.s8 %v3107
  %v3109 = vlaneseq
  %v3110 = vshrl.u32 %v3109, 7
  %v3111 = vsub.s32 %v3108, %v3110
  %v3112 = vrot.slane %v3105, %v3111
  %v3114 = vlaneseq
  %vm3115 = vcmp.ge.s32.totalorder %v3114, 0
  %vm3116 = vcmp.lt.s32.totalorder %v3114, 512
  %vm3117 = vmand %vm3115, %vm3116
  %3118 = vst.msk [vmem:[%s4] sm:$0xf] %vm3117, %v3112
  // Predicated region
  $region18: #{prenet_forward.1} parent=0 // pred_check
    _
  $region19: #{prenet_forward.1} parent=0 // pred_check_branch
    %3120 = sbr.rel (0) target = $region21
  $region20: #{prenet_forward.1} parent=0 // pred_region
    _
  $region21: #{prenet_forward.1} parent=0 // pred_fallthru
    _
  // Predicated region
  $region22: #{prenet_forward.1} parent=0 // pred_check
    _
  $region23: #{prenet_forward.1} parent=0 // pred_check_branch
    %3122 = sbr.rel (0) target = $region25
  $region24: #{prenet_forward.1} parent=0 // pred_region
    _
  $region25: #{prenet_forward.1} parent=0 // pred_fallthru
    _

</llo_original>
